<compile_context>
chip_gen: v6e
topology: v6e:2x2x1
jax: 0.10.0
libtpu: 0.0.40
codegen_flags: <defaults>
</compile_context>

<pallas_src>
import jax
import jax.numpy as jnp
from jax.experimental import pallas as pl
from jax.experimental.pallas import tpu as pltpu

_LANE = 128


def _round_up(v, m):
    return (v + m - 1) // m * m


def _cdiv(a, b):
    return (a + b - 1) // b


def _physical_vmem_bytes():
    try:
        cap = getattr(pltpu.get_tpu_info(), "vmem_capacity_bytes", None)
        if cap:
            return int(cap)
    except Exception:
        pass
    return 64 << 20  # conservative: v7x per-TensorCore VMEM


def _fc6_chunk(out_pad):
    for c in (512, 256, 128):
        if out_pad % c == 0:
            return c
    return out_pad


def _pick_tk(in_feat_pad, max_tk):
    for c in (2048, 1024, 512, 256, 128):
        if c <= max_tk and in_feat_pad % c == 0:
            return c
    return 128


# ----------------------------- kernels --------------------------------------


def _resident_kernel(x_ref, w6_ref, b6_ref, w7_ref, b7_ref, o_ref, h_ref):
    """Whole fc6 + fc7 per row tile; both weight matrices resident in VMEM."""
    x = x_ref[...].astype(jnp.bfloat16)
    out_pad = h_ref.shape[1]
    chunk = _fc6_chunk(out_pad)
    # fc6 + bias + ReLU, 'chunk' output lanes at a time into a bf16 scratch:
    # keeps the f32 intermediate bounded to (tm, chunk) vregs (v5e spill fix).
    for c in range(out_pad // chunk):
        sl = slice(c * chunk, (c + 1) * chunk)
        hc = jnp.dot(x, w6_ref[:, sl], preferred_element_type=jnp.float32)
        hc = jnp.maximum(hc + b6_ref[:, sl], 0.0)
        h_ref[:, sl] = hc.astype(jnp.bfloat16)
    # fc7 + bias + ReLU
    y = jnp.dot(h_ref[...], w7_ref[...], preferred_element_type=jnp.float32)
    y = jnp.maximum(y + b7_ref[...], 0.0)
    o_ref[...] = y.astype(o_ref.dtype)


def _ktiled_kernel(x_ref, w6_ref, b6_ref, w7_ref, b7_ref, o_ref, acc_ref):
    """fc6 reduction tiled over in_features (grid axis 1, 'arbitrary')."""
    k = pl.program_id(1)

    @pl.when(k == 0)
    def _():
        acc_ref[...] = jnp.zeros_like(acc_ref)

    acc_ref[...] += jnp.dot(x_ref[...].astype(jnp.bfloat16), w6_ref[...],
                            preferred_element_type=jnp.float32)

    @pl.when(k == pl.num_programs(1) - 1)
    def _():
        h = jnp.maximum(acc_ref[...] + b6_ref[...], 0.0).astype(jnp.bfloat16)
        y = jnp.dot(h, w7_ref[...], preferred_element_type=jnp.float32)
        y = jnp.maximum(y + b7_ref[...], 0.0)
        o_ref[...] = y.astype(o_ref.dtype)


# ----------------------------- wrappers -------------------------------------


def two_mlp_head_prepare(w6, b6, w7, b7, *, mode=None):
    """Pad/cast fc6/fc7 parameters once (lane-dense, bf16). Call at init, reuse.

    mode: None (auto), "resident" (weights kept in VMEM), or "ktiled"
    (fc6 reduction tiled over in_features; for weights too big for VMEM).
    """
    in_feat, out_feat = w6.shape
    assert w7.shape == (out_feat, out_feat)
    assert b6.shape == (out_feat,) and b7.shape == (out_feat,)
    out_pad = _round_up(out_feat, _LANE)

    if mode is None:
        weight_bytes = (in_feat * out_pad + out_pad * out_pad) * 2 + 2 * out_pad * 4
        # Keep ~45% of physical VMEM for pipelined x/out tiles, scratch, headroom.
        mode = "resident" if weight_bytes <= 0.55 * _physical_vmem_bytes() else "ktiled"
    assert mode in ("resident", "ktiled")

    in_feat_pad = in_feat if mode == "resident" else _round_up(in_feat, _LANE)

    w6_p = (jnp.zeros((in_feat_pad, out_pad), jnp.bfloat16)
            .at[:in_feat, :out_feat].set(w6.astype(jnp.bfloat16)))
    w7_p = (jnp.zeros((out_pad, out_pad), jnp.bfloat16)
            .at[:out_feat, :out_feat].set(w7.astype(jnp.bfloat16)))
    b6_p = jnp.zeros((1, out_pad), jnp.float32).at[0, :out_feat].set(b6.astype(jnp.float32))
    b7_p = jnp.zeros((1, out_pad), jnp.float32).at[0, :out_feat].set(b7.astype(jnp.float32))
    return (mode, w6_p, b6_p, w7_p, b7_p, out_feat, in_feat)


def two_mlp_head_apply(x, params, *, out_dtype=jnp.float32, max_tk=2048):
    """Forward pass. x: (N, ...) is flattened to (N, in_features)."""
    mode, w6_p, b6_p, w7_p, b7_p, out_feat, in_feat = params
    n = x.shape[0]
    x2d = x.reshape(n, -1)  # flatten(start_dim=1) -- cheap reshape, no copy pass
    assert x2d.shape[1] == in_feat, (x2d.shape, in_feat)
    in_feat_pad, out_pad = w6_p.shape
    x_bytes = jnp.dtype(x2d.dtype).itemsize
    o_bytes = jnp.dtype(out_dtype).itemsize

    # Row tile: multiple of 16 (bf16 sublanes), capped at 256 (amortizes per-step
    # overhead, matches 256-wide MXU on v6e/v7x), and chosen so moderate batches
    # produce >= 2 grid steps for the two v7x TensorCores.
    if n >= 32:
        tm = max(16, min(256, _round_up(_cdiv(n, 2), 16)))
    else:
        tm = 16
    grid_m = _cdiv(n, tm)

    vmem_cap = max(_physical_vmem_bytes() - (4 << 20), 16 << 20)

    def run(resident_buffers):
        if resident_buffers is None:
            res_kw, wmult = {}, 2  # default Pallas double-buffering
        else:
            res_kw = {"pipeline_mode": pl.Buffered(resident_buffers)}
            wmult = resident_buffers

        if mode == "resident":
            weight_bytes = ((in_feat_pad * out_pad + out_pad * out_pad) * 2
                            + 2 * out_pad * 4)
            needed = (wmult * weight_bytes
                      + 2 * tm * in_feat_pad * x_bytes   # pipelined x tiles
                      + 2 * tm * out_pad * o_bytes       # pipelined out tiles
                      + tm * out_pad * 2                 # bf16 h scratch
                      + (8 << 20))
            cost = pl.CostEstimate(
                flops=2 * n * (in_feat_pad * out_pad + out_pad * out_pad),
                transcendentals=0,
                bytes_accessed=(n * in_feat_pad * x_bytes + weight_bytes
                                + n * out_pad * o_bytes))
            return pl.pallas_call(
                _resident_kernel,
                out_shape=jax.ShapeDtypeStruct((n, out_pad), out_dtype),
                grid_spec=pltpu.PrefetchScalarGridSpec(
                    num_scalar_prefetch=0,
                    grid=(grid_m,),
                    in_specs=[
                        pl.BlockSpec((tm, in_feat_pad), lambda i: (i, 0)),
                        pl.BlockSpec((in_feat_pad, out_pad), lambda i: (0, 0), **res_kw),
                        pl.BlockSpec((1, out_pad), lambda i: (0, 0), **res_kw),
                        pl.BlockSpec((out_pad, out_pad), lambda i: (0, 0), **res_kw),
                        pl.BlockSpec((1, out_pad), lambda i: (0, 0), **res_kw),
                    ],
                    out_specs=pl.BlockSpec((tm, out_pad), lambda i: (i, 0)),
                    scratch_shapes=[pltpu.VMEM((tm, out_pad), jnp.bfloat16)],
                ),
                compiler_params=pltpu.CompilerParams(
                    dimension_semantics=("parallel",),
                    vmem_limit_bytes=int(min(max(needed, min(32 << 20, vmem_cap)),
                                             vmem_cap)),
                ),
                cost_estimate=cost,
            )(x2d, w6_p, b6_p, w7_p, b7_p)

        # ---- K-tiled fallback (weights too big to keep resident) ----
        xk = x2d
        if in_feat_pad != in_feat:
            xk = jnp.pad(x2d, ((0, 0), (0, in_feat_pad - in_feat)))
        tk = _pick_tk(in_feat_pad, max_tk)
        grid_k = in_feat_pad // tk

        resident_small = out_pad * out_pad * 2 + 2 * out_pad * 4
        needed = (wmult * resident_small
                  + 2 * tk * out_pad * 2                # pipelined w6 K-slabs
                  + 2 * tm * tk * x_bytes               # pipelined x tiles
                  + 2 * tm * out_pad * o_bytes          # pipelined out tiles
                  + tm * out_pad * 4                    # f32 accumulator scratch
                  + (8 << 20))
        cost = pl.CostEstimate(
            flops=2 * n * (in_feat_pad * out_pad + out_pad * out_pad),
            transcendentals=0,
            bytes_accessed=(n * in_feat_pad * x_bytes
                            + grid_m * in_feat_pad * out_pad * 2  # w6 restreamed per row tile
                            + resident_small + n * out_pad * o_bytes))
        return pl.pallas_call(
            _ktiled_kernel,
            out_shape=jax.ShapeDtypeStruct((n, out_pad), out_dtype),
            grid_spec=pltpu.PrefetchScalarGridSpec(
                num_scalar_prefetch=0,
                grid=(grid_m, grid_k),
                in_specs=[
                    pl.BlockSpec((tm, tk), lambda i, k: (i, k)),
                    pl.BlockSpec((tk, out_pad), lambda i, k: (k, 0)),
                    pl.BlockSpec((1, out_pad), lambda i, k: (0, 0), **res_kw),
                    pl.BlockSpec((out_pad, out_pad), lambda i, k: (0, 0), **res_kw),
                    pl.BlockSpec((1, out_pad), lambda i, k: (0, 0), **res_kw),
                ],
                out_specs=pl.BlockSpec((tm, out_pad), lambda i, k: (i, 0)),
                scratch_shapes=[pltpu.VMEM((tm, out_pad), jnp.float32)],
            ),
            compiler_params=pltpu.CompilerParams(
                dimension_semantics=("parallel", "arbitrary"),
                vmem_limit_bytes=int(min(max(needed, min(32 << 20, vmem_cap)),
                                         vmem_cap)),
            ),
            cost_estimate=cost,
        )(xk, w6_p, b6_p, w7_p, b7_p)

    try:
        out_padded = run(1)            # single-buffered resident weights
    except Exception:
        out_padded = run(None)         # this jax build rejects Buffered(1): default buffering

    return out_padded[:, :out_feat]


def two_mlp_head(x, w6, b6, w7, b7, *, allow_xla_fallback=True, out_dtype=jnp.float32):
    """One-shot convenience wrapper. For repeated calls, hoist
    two_mlp_head_prepare() out of the step and call two_mlp_head_apply()."""
    n = x.shape[0]
    out_feat = w6.shape[1]
    if allow_xla_fallback and (n <= 64 or out_feat <= 64):
        # Tiny problems: pallas_call overhead + 128-lane padding dominate; plain
        # XLA matmuls are faster and match the module semantics exactly.
        x2d = x.reshape(n, -1)
        h = jnp.maximum(x2d @ w6 + b6, 0.0)
        return jnp.maximum(h @ w7 + b7, 0.0).astype(out_dtype)
    params = two_mlp_head_prepare(w6, b6, w7, b7)
    return two_mlp_head_apply(x, params, out_dtype=out_dtype)


def reference(x, w6, b6, w7, b7):
    x2d = x.reshape(x.shape[0], -1)
    h = jnp.maximum(x2d @ w6 + b6, 0.0)
    return jnp.maximum(h @ w7 + b7, 0.0)


if __name__ == "__main__":
    # Module config implied by forward(): in_channels = C*H*W, out_channels = hidden.
    N, C, H, W = 2, 4, 16, 16
    in_channels = C * H * W          # 1024
    out_channels = 32

    key = jax.random.PRNGKey(0)
    kx, k6w, k6b, k7w, k7b = jax.random.split(key, 5)

    x = jax.random.normal(kx, (N, C, H, W), dtype=jnp.float32)
    w6 = jax.random.normal(k6w, (in_channels, out_channels), dtype=jnp.float32) * 0.02
    b6 = jax.random.normal(k6b, (out_channels,), dtype=jnp.float32) * 0.02
    w7 = jax.random.normal(k7w, (out_channels, out_channels), dtype=jnp.float32) * 0.02
    b7 = jax.random.normal(k7b, (out_channels,), dtype=jnp.float32) * 0.02

    ref = reference(x, w6, b6, w7, b7)

    # Resident-weights Pallas path (default for these sizes); prepare hoisted.
    params = two_mlp_head_prepare(w6, b6, w7, b7)
    out = two_mlp_head_apply(x, params)
    jax.block_until_ready(out)
    assert out.shape == (N, out_channels)
    # bf16 MXU operands with f32 accumulation -> looser tolerance vs f32 reference.
    assert jnp.allclose(out, ref, atol=2e-2, rtol=2e-2), (
        f"resident: max abs err {jnp.max(jnp.abs(out - ref))}")

    # K-tiled fallback path (what very large backbones would use on v7x):
    # force it and a small K tile so the accumulator loop is actually exercised.
    params_kt = two_mlp_head_prepare(w6, b6, w7, b7, mode="ktiled")
    out_kt = two_mlp_head_apply(x, params_kt, max_tk=256)
    jax.block_until_ready(out_kt)
    assert out_kt.shape == (N, out_channels)
    assert jnp.allclose(out_kt, ref, atol=2e-2, rtol=2e-2), (
        f"ktiled: max abs err {jnp.max(jnp.abs(out_kt - ref))}")

    print("KERNEL_OK")
</pallas_src>

<mosaic_0001>
module attributes {stable_mosaic.version = 11 : i64} {
  func.func @_resident_kernel(%arg0: i32, %arg1: memref<16x1024xf32, #tpu.memory_space<vmem>>, %arg2: memref<1024x128xbf16, #tpu.memory_space<vmem>>, %arg3: memref<1x128xf32, #tpu.memory_space<vmem>>, %arg4: memref<128x128xbf16, #tpu.memory_space<vmem>>, %arg5: memref<1x128xf32, #tpu.memory_space<vmem>>, %arg6: memref<16x128xf32, #tpu.memory_space<vmem>>, %arg7: memref<16x128xbf16, #tpu.memory_space<vmem>>) attributes {dimension_semantics = [#tpu.dimension_semantics<parallel>], iteration_bounds = array<i64: 1>, scalar_prefetch = 0 : i64, scratch_operands = 1 : i64, tpu.core_type = #tpu.core_type<tc>, window_params = [{transform_indices = @transform_0, window_bounds = array<i64: 16, 1024>}, {pipeline_mode = #tpu.pipeline_mode<synchronous>, transform_indices = @transform_1, window_bounds = array<i64: 1024, 128>}, {pipeline_mode = #tpu.pipeline_mode<synchronous>, transform_indices = @transform_2, window_bounds = array<i64: 1, 128>}, {pipeline_mode = #tpu.pipeline_mode<synchronous>, transform_indices = @transform_3, window_bounds = array<i64: 128, 128>}, {pipeline_mode = #tpu.pipeline_mode<synchronous>, transform_indices = @transform_4, window_bounds = array<i64: 1, 128>}, {transform_indices = @transform_5, window_bounds = array<i64: 16, 128>}]} {
    %c0 = arith.constant 0 : index
    %c0_0 = arith.constant 0 : index
    %0 = vector.load %arg1[%c0, %c0_0] : memref<16x1024xf32, #tpu.memory_space<vmem>>, vector<16x1024xf32>
    %1 = arith.truncf %0 : vector<16x1024xf32> to vector<16x1024xbf16>
    %c0_1 = arith.constant 0 : index
    %c0_2 = arith.constant 0 : index
    %2 = vector.load %arg2[%c0_1, %c0_2] : memref<1024x128xbf16, #tpu.memory_space<vmem>>, vector<1024x128xbf16>
    %cst = arith.constant dense<0.000000e+00> : vector<16x128xf32>
    %3 = tpu.matmul %1, %2, %cst {dimension_numbers = #tpu.dot_dimension_numbers<[1], [0], [0], [1], [0, 0, 1, 1], [], []>} : vector<16x1024xbf16>, vector<1024x128xbf16>, vector<16x128xf32> -> vector<16x128xf32>
    %c0_3 = arith.constant 0 : index
    %c0_4 = arith.constant 0 : index
    %4 = vector.load %arg3[%c0_3, %c0_4] : memref<1x128xf32, #tpu.memory_space<vmem>>, vector<1x128xf32>
    %5 = vector.broadcast %4 : vector<1x128xf32> to vector<16x128xf32>
    %6 = arith.addf %3, %5 : vector<16x128xf32>
    %cst_5 = arith.constant 0.000000e+00 : f32
    %7 = vector.broadcast %cst_5 : f32 to vector<16x128xf32>
    %8 = arith.maximumf %6, %7 : vector<16x128xf32>
    %9 = arith.truncf %8 : vector<16x128xf32> to vector<16x128xbf16>
    %c0_6 = arith.constant 0 : index
    %c0_7 = arith.constant 0 : index
    %10 = vector.load %arg7[%c0_6, %c0_7] : memref<16x128xbf16, #tpu.memory_space<vmem>>, vector<16x128xbf16>
    tpu.vector_store %arg7[%c0_6, %c0_7], %9 {strides = array<i32>} : memref<16x128xbf16, #tpu.memory_space<vmem>>, vector<16x128xbf16>,
    %c0_8 = arith.constant 0 : index
    %c0_9 = arith.constant 0 : index
    %11 = vector.load %arg7[%c0_8, %c0_9] : memref<16x128xbf16, #tpu.memory_space<vmem>>, vector<16x128xbf16>
    %c0_10 = arith.constant 0 : index
    %c0_11 = arith.constant 0 : index
    %12 = vector.load %arg4[%c0_10, %c0_11] : memref<128x128xbf16, #tpu.memory_space<vmem>>, vector<128x128xbf16>
    %cst_12 = arith.constant dense<0.000000e+00> : vector<16x128xf32>
    %13 = tpu.matmul %11, %12, %cst_12 {dimension_numbers = #tpu.dot_dimension_numbers<[1], [0], [0], [1], [0, 0, 1, 1], [], []>} : vector<16x128xbf16>, vector<128x128xbf16>, vector<16x128xf32> -> vector<16x128xf32>
    %c0_13 = arith.constant 0 : index
    %c0_14 = arith.constant 0 : index
    %14 = vector.load %arg5[%c0_13, %c0_14] : memref<1x128xf32, #tpu.memory_space<vmem>>, vector<1x128xf32>
    %15 = vector.broadcast %14 : vector<1x128xf32> to vector<16x128xf32>
    %16 = arith.addf %13, %15 : vector<16x128xf32>
    %cst_15 = arith.constant 0.000000e+00 : f32
    %17 = vector.broadcast %cst_15 : f32 to vector<16x128xf32>
    %18 = arith.maximumf %16, %17 : vector<16x128xf32>
    %c0_16 = arith.constant 0 : index
    %c0_17 = arith.constant 0 : index
    %19 = vector.load %arg6[%c0_16, %c0_17] : memref<16x128xf32, #tpu.memory_space<vmem>>, vector<16x128xf32>
    tpu.vector_store %arg6[%c0_16, %c0_17], %18 {strides = array<i32>} : memref<16x128xf32, #tpu.memory_space<vmem>>, vector<16x128xf32>,
    return
  }
  func.func @transform_0(%arg0: i32) -> (i32, i32) {
    %c0_i32 = arith.constant 0 : i32
    %c0_i32_0 = arith.constant 0 : i32
    return %arg0, %c0_i32 : i32, i32
  }
  func.func @transform_1(%arg0: i32) -> (i32, i32) {
    %c0_i32 = arith.constant 0 : i32
    %c0_i32_0 = arith.constant 0 : i32
    %c0_i32_1 = arith.constant 0 : i32
    return %c0_i32, %c0_i32_0 : i32, i32
  }
  func.func @transform_2(%arg0: i32) -> (i32, i32) {
    %c0_i32 = arith.constant 0 : i32
    %c0_i32_0 = arith.constant 0 : i32
    %c0_i32_1 = arith.constant 0 : i32
    return %c0_i32, %c0_i32_0 : i32, i32
  }
  func.func @transform_3(%arg0: i32) -> (i32, i32) {
    %c0_i32 = arith.constant 0 : i32
    %c0_i32_0 = arith.constant 0 : i32
    %c0_i32_1 = arith.constant 0 : i32
    return %c0_i32, %c0_i32_0 : i32, i32
  }
  func.func @transform_4(%arg0: i32) -> (i32, i32) {
    %c0_i32 = arith.constant 0 : i32
    %c0_i32_0 = arith.constant 0 : i32
    %c0_i32_1 = arith.constant 0 : i32
    return %c0_i32, %c0_i32_0 : i32, i32
  }
  func.func @transform_5(%arg0: i32) -> (i32, i32) {
    %c0_i32 = arith.constant 0 : i32
    %c0_i32_0 = arith.constant 0 : i32
    return %arg0, %c0_i32 : i32, i32
  }
}

module attributes {stable_mosaic.version = 11 : i64} {
  func.func @_resident_kernel(%arg0: i32, %arg1: memref<16x1024xf32, #tpu.memory_space<vmem>>, %arg2: memref<1024x128xbf16, #tpu.memory_space<vmem>>, %arg3: memref<1x128xf32, #tpu.memory_space<vmem>>, %arg4: memref<128x128xbf16, #tpu.memory_space<vmem>>, %arg5: memref<1x128xf32, #tpu.memory_space<vmem>>, %arg6: memref<16x128xf32, #tpu.memory_space<vmem>>, %arg7: memref<16x128xbf16, #tpu.memory_space<vmem>>) attributes {dimension_semantics = [#tpu.dimension_semantics<parallel>], iteration_bounds = array<i64: 1>, scalar_prefetch = 0 : i64, scratch_operands = 1 : i64, tpu.core_type = #tpu.core_type<tc>, window_params = [{transform_indices = @transform_0, window_bounds = array<i64: 16, 1024>}, {pipeline_mode = #tpu.pipeline_mode<synchronous>, transform_indices = @transform_1, window_bounds = array<i64: 1024, 128>}, {pipeline_mode = #tpu.pipeline_mode<synchronous>, transform_indices = @transform_2, window_bounds = array<i64: 1, 128>}, {pipeline_mode = #tpu.pipeline_mode<synchronous>, transform_indices = @transform_3, window_bounds = array<i64: 128, 128>}, {pipeline_mode = #tpu.pipeline_mode<synchronous>, transform_indices = @transform_4, window_bounds = array<i64: 1, 128>}, {transform_indices = @transform_5, window_bounds = array<i64: 16, 128>}]} {
    %c0 = arith.constant 0 : index
    %c0_0 = arith.constant 0 : index
    %0 = vector.load %arg1[%c0, %c0_0] : memref<16x1024xf32, #tpu.memory_space<vmem>>, vector<16x1024xf32>
    %1 = arith.truncf %0 : vector<16x1024xf32> to vector<16x1024xbf16>
    %c0_1 = arith.constant 0 : index
    %c0_2 = arith.constant 0 : index
    %2 = vector.load %arg2[%c0_1, %c0_2] : memref<1024x128xbf16, #tpu.memory_space<vmem>>, vector<1024x128xbf16>
    %cst = arith.constant dense<0.000000e+00> : vector<16x128xf32>
    %3 = tpu.matmul %1, %2, %cst {dimension_numbers = #tpu.dot_dimension_numbers<[1], [0], [0], [1], [0, 0, 1, 1], [], []>} : vector<16x1024xbf16>, vector<1024x128xbf16>, vector<16x128xf32> -> vector<16x128xf32>
    %c0_3 = arith.constant 0 : index
    %c0_4 = arith.constant 0 : index
    %4 = vector.load %arg3[%c0_3, %c0_4] : memref<1x128xf32, #tpu.memory_space<vmem>>, vector<1x128xf32>
    %5 = vector.broadcast %4 : vector<1x128xf32> to vector<16x128xf32>
    %6 = arith.addf %3, %5 : vector<16x128xf32>
    %cst_5 = arith.constant 0.000000e+00 : f32
    %7 = vector.broadcast %cst_5 : f32 to vector<16x128xf32>
    %8 = arith.maximumf %6, %7 : vector<16x128xf32>
    %9 = arith.truncf %8 : vector<16x128xf32> to vector<16x128xbf16>
    %c0_6 = arith.constant 0 : index
    %c0_7 = arith.constant 0 : index
    %10 = vector.load %arg7[%c0_6, %c0_7] : memref<16x128xbf16, #tpu.memory_space<vmem>>, vector<16x128xbf16>
    tpu.vector_store %arg7[%c0_6, %c0_7], %9 {strides = array<i32>} : memref<16x128xbf16, #tpu.memory_space<vmem>>, vector<16x128xbf16>,
    %c0_8 = arith.constant 0 : index
    %c0_9 = arith.constant 0 : index
    %11 = vector.load %arg7[%c0_8, %c0_9] : memref<16x128xbf16, #tpu.memory_space<vmem>>, vector<16x128xbf16>
    %c0_10 = arith.constant 0 : index
    %c0_11 = arith.constant 0 : index
    %12 = vector.load %arg4[%c0_10, %c0_11] : memref<128x128xbf16, #tpu.memory_space<vmem>>, vector<128x128xbf16>
    %cst_12 = arith.constant dense<0.000000e+00> : vector<16x128xf32>
    %13 = tpu.matmul %11, %12, %cst_12 {dimension_numbers = #tpu.dot_dimension_numbers<[1], [0], [0], [1], [0, 0, 1, 1], [], []>} : vector<16x128xbf16>, vector<128x128xbf16>, vector<16x128xf32> -> vector<16x128xf32>
    %c0_13 = arith.constant 0 : index
    %c0_14 = arith.constant 0 : index
    %14 = vector.load %arg5[%c0_13, %c0_14] : memref<1x128xf32, #tpu.memory_space<vmem>>, vector<1x128xf32>
    %15 = vector.broadcast %14 : vector<1x128xf32> to vector<16x128xf32>
    %16 = arith.addf %13, %15 : vector<16x128xf32>
    %cst_15 = arith.constant 0.000000e+00 : f32
    %17 = vector.broadcast %cst_15 : f32 to vector<16x128xf32>
    %18 = arith.maximumf %16, %17 : vector<16x128xf32>
    %c0_16 = arith.constant 0 : index
    %c0_17 = arith.constant 0 : index
    %19 = vector.load %arg6[%c0_16, %c0_17] : memref<16x128xf32, #tpu.memory_space<vmem>>, vector<16x128xf32>
    tpu.vector_store %arg6[%c0_16, %c0_17], %18 {strides = array<i32>} : memref<16x128xf32, #tpu.memory_space<vmem>>, vector<16x128xf32>,
    return
  }
  func.func @transform_0(%arg0: i32) -> (i32, i32) {
    %c0_i32 = arith.constant 0 : i32
    %c0_i32_0 = arith.constant 0 : i32
    return %arg0, %c0_i32 : i32, i32
  }
  func.func @transform_1(%arg0: i32) -> (i32, i32) {
    %c0_i32 = arith.constant 0 : i32
    %c0_i32_0 = arith.constant 0 : i32
    %c0_i32_1 = arith.constant 0 : i32
    return %c0_i32, %c0_i32_0 : i32, i32
  }
  func.func @transform_2(%arg0: i32) -> (i32, i32) {
    %c0_i32 = arith.constant 0 : i32
    %c0_i32_0 = arith.constant 0 : i32
    %c0_i32_1 = arith.constant 0 : i32
    return %c0_i32, %c0_i32_0 : i32, i32
  }
  func.func @transform_3(%arg0: i32) -> (i32, i32) {
    %c0_i32 = arith.constant 0 : i32
    %c0_i32_0 = arith.constant 0 : i32
    %c0_i32_1 = arith.constant 0 : i32
    return %c0_i32, %c0_i32_0 : i32, i32
  }
  func.func @transform_4(%arg0: i32) -> (i32, i32) {
    %c0_i32 = arith.constant 0 : i32
    %c0_i32_0 = arith.constant 0 : i32
    %c0_i32_1 = arith.constant 0 : i32
    return %c0_i32, %c0_i32_0 : i32, i32
  }
  func.func @transform_5(%arg0: i32) -> (i32, i32) {
    %c0_i32 = arith.constant 0 : i32
    %c0_i32_0 = arith.constant 0 : i32
    return %arg0, %c0_i32 : i32, i32
  }
}

</mosaic_0001>

<llo_original>
// kernel: tpu_custom_call.1
$region0: #{tpu_custom_call.1}
  #allocation0 [shape = 'u32[]', space=smem, size = 0x4, offset = 0x4, fixed_abs, tag = 'smem constant byte address 0x4 - core index']
  #allocation1 [shape = 'u32[144,128]{1,0:T(1,128)}', space=vmem, size = 0x12000, scoped, tag = 'internal scratch']
  #allocation2 [shape = 'bf16[16,128]{1,0:T(8,128)(2,1)}', space=vmem, size = 0x1000, scoped, tag = 'scratch operand']
  %s0 = inlined_call_operand.hbm [shape: f32[2,1024], index: 0, kind: input, shape index: {}]
  %s1 = inlined_call_operand.hbm [shape: bf16[1024,128], index: 1, kind: input, shape index: {}]
  %s2 = inlined_call_operand.vmem [shape: f32[1,128], index: 2, kind: input, shape index: {}]
  %s3 = inlined_call_operand.hbm [shape: bf16[128,128], index: 3, kind: input, shape index: {}]
  %s4 = inlined_call_operand.vmem [shape: f32[1,128], index: 4, kind: input, shape index: {}]
  %s5 = inlined_call_operand.hbm [shape: f32[2,128], index: 5, kind: output, shape index: {}]
  %s6 = sld [smem:[#allocation0]]
  $region42: #{tpu_custom_call.1} parent=0
    _
  %s8 = ssub.s32 1, %s6
  %s9 = scalar_select 0, %s8, %s6
  $region1: #{tpu_custom_call.1} parent=0
    #allocation3 [shape = 'u8[65536]{0}', space=vmem, size = 0x10000, scoped, tag = 'input window, operand 0, single buffered']
    #allocation4 [shape = 's32[1]{0}', space=sflag, size = 0x4, scoped, tag = 'scoped memory for tpu_custom_call.1']
    #allocation5 [shape = 's32[1]{0}', space=sflag, size = 0x4, scoped, tag = 'scoped memory for tpu_custom_call.1']
    #allocation6 [shape = 'u8[262144]{0}', space=vmem, size = 0x40000, scoped, tag = 'input window, operand 1, single buffered']
    #allocation7 [shape = 's32[1]{0}', space=sflag, size = 0x4, scoped, tag = 'scoped memory for tpu_custom_call.1']
    #allocation8 [shape = 'u8[32768]{0}', space=vmem, size = 0x8000, scoped, tag = 'input window, operand 3, single buffered']
    #allocation9 [shape = 'u8[8192]{0}', space=vmem, size = 0x2000, scoped, tag = 'output window, operand 0, single buffered']
    %10 = vsyncpa [#allocation4], 0
    %11 = vsyncpa [#allocation7], 0
    %12 = vsyncpa [#allocation5], 0
    // Predicated region
    $region2: #{tpu_custom_call.1} parent=1 // pred_check
      _
    $region3: #{tpu_custom_call.1} parent=1 // pred_check_branch
      %14 = sbr.rel (0) target = $region5
    $region4: #{tpu_custom_call.1} parent=1 // pred_region
      %s16 = ssub.s32 2048, 256
      %17 = vsyncadd [#allocation4], %s16
      %s18 = sshll.u32 [#allocation3], 4
      %s19 = int_to_ptr.vmem [resolvable:$true] %s18
      %24 = dma.hbm_to_vmem [thread:$0]  %s0, 256, %s19, [#allocation4], 256, 256, 16
    $region5: #{tpu_custom_call.1} parent=1 // pred_fallthru
      _
    // Predicated region
    $region6: #{tpu_custom_call.1} parent=1 // pred_check
      _
    $region7: #{tpu_custom_call.1} parent=1 // pred_check_branch
      %26 = sbr.rel (0) target = $region9
    $region8: #{tpu_custom_call.1} parent=1 // pred_region
      %s28 = ssub.s32 8192, 8192
      %29 = vsyncadd [#allocation7], %s28
      %s30 = sshll.u32 [#allocation6], 4
      %s31 = int_to_ptr.vmem [resolvable:$true] %s30
      %36 = dma.hbm_to_vmem [thread:$0]  %s1, 8192, %s31, [#allocation7], 64, 64, 4
    $region9: #{tpu_custom_call.1} parent=1 // pred_fallthru
      _
    // Predicated region
    $region10: #{tpu_custom_call.1} parent=1 // pred_check
      _
    $region11: #{tpu_custom_call.1} parent=1 // pred_check_branch
      %38 = sbr.rel (0) target = $region13
    $region12: #{tpu_custom_call.1} parent=1 // pred_region
      _
    $region13: #{tpu_custom_call.1} parent=1 // pred_fallthru
      _
    // Predicated region
    $region14: #{tpu_custom_call.1} parent=1 // pred_check
      _
    $region15: #{tpu_custom_call.1} parent=1 // pred_check_branch
      %40 = sbr.rel (0) target = $region17
    $region16: #{tpu_custom_call.1} parent=1 // pred_region
      %s42 = ssub.s32 1024, 1024
      %43 = vsyncadd [#allocation7], %s42
      %s44 = sshll.u32 [#allocation8], 4
      %s45 = int_to_ptr.vmem [resolvable:$true] %s44
      %50 = dma.hbm_to_vmem [thread:$0]  %s3, 1024, %s45, [#allocation7], 64, 64, 4
    $region17: #{tpu_custom_call.1} parent=1 // pred_fallthru
      _
    // Predicated region
    $region18: #{tpu_custom_call.1} parent=1 // pred_check
      _
    $region19: #{tpu_custom_call.1} parent=1 // pred_check_branch
      %52 = sbr.rel (0) target = $region21
    $region20: #{tpu_custom_call.1} parent=1 // pred_region
      _
    $region21: #{tpu_custom_call.1} parent=1 // pred_fallthru
      _
    // Predicated region
    $region22: #{tpu_custom_call.1} parent=1 // pred_check
      _
    $region23: #{tpu_custom_call.1} parent=1 // pred_check_branch
      %54 = sbr.rel (0) target = $region25
    $region24: #{tpu_custom_call.1} parent=1 // pred_region
      %55 = dma.done [#allocation4], 2048
    $region25: #{tpu_custom_call.1} parent=1 // pred_fallthru
      _
    // Predicated region
    $region26: #{tpu_custom_call.1} parent=1 // pred_check
      _
    $region27: #{tpu_custom_call.1} parent=1 // pred_check_branch
      %57 = sbr.rel (0) target = $region29
    $region28: #{tpu_custom_call.1} parent=1 // pred_region
      %58 = dma.done [#allocation7], 8192
    $region29: #{tpu_custom_call.1} parent=1 // pred_fallthru
      _
    // Predicated region
    $region30: #{tpu_custom_call.1} parent=1 // pred_check
      _
    $region31: #{tpu_custom_call.1} parent=1 // pred_check_branch
      %60 = sbr.rel (0) target = $region33
    $region32: #{tpu_custom_call.1} parent=1 // pred_region
      %61 = dma.done [#allocation7], 1024
    $region33: #{tpu_custom_call.1} parent=1 // pred_fallthru
      _
    %v63 = vld [vmem:[#allocation3] sm:$0xff]
    %v64 = vld [vmem:[#allocation3 + $0x8] sm:$0xff]
    %v65 = vld [vmem:[#allocation3 + $0x10] sm:$0xff]
    %v66 = vld [vmem:[#allocation3 + $0x18] sm:$0xff]
    %v67 = vld [vmem:[#allocation3 + $0x20] sm:$0xff]
    %v68 = vld [vmem:[#allocation3 + $0x28] sm:$0xff]
    %v69 = vld [vmem:[#allocation3 + $0x30] sm:$0xff]
    %v70 = vld [vmem:[#allocation3 + $0x38] sm:$0xff]
    %v71 = vld [vmem:[#allocation3 + $0x40] sm:$0xff]
    %v72 = vld [vmem:[#allocation3 + $0x48] sm:$0xff]
    %v73 = vld [vmem:[#allocation3 + $0x50] sm:$0xff]
    %v74 = vld [vmem:[#allocation3 + $0x58] sm:$0xff]
    %v75 = vld [vmem:[#allocation3 + $0x60] sm:$0xff]
    %v76 = vld [vmem:[#allocation3 + $0x68] sm:$0xff]
    %v77 = vld [vmem:[#allocation3 + $0x70] sm:$0xff]
    %v78 = vld [vmem:[#allocation3 + $0x78] sm:$0xff]
    %v95 = vcombine.low %v63, %v65
    %v96 = vcombine.high %v63, %v65
    %v97 = vcombine.low %v67, %v69
    %v98 = vcombine.high %v67, %v69
    %v100 = vunpack.c.l.s4 1983009808
    %v101 = vunpack.c.0.s8 %v100
    %v102 = vlaneseq
    %v103 = vshrl.u32 %v102, 7
    %v104 = vsub.s32 %v101, %v103
    %v105 = vrot.slane %v95, %v104
    %v107 = vunpack.c.l.s4 1983009808
    %v108 = vunpack.c.0.s8 %v107
    %v109 = vlaneseq
    %v110 = vshrl.u32 %v109, 7
    %v111 = vsub.s32 %v108, %v110
    %v112 = vrot.slane %v96, %v111
    %v114 = vunpack.c.l.s4 1983009808
    %v115 = vunpack.c.0.s8 %v114
    %v116 = vlaneseq
    %v117 = vshrl.u32 %v116, 7
    %v118 = vsub.s32 %v115, %v117
    %v119 = vrot.slane %v97, %v118
    %v121 = vunpack.c.l.s4 1983009808
    %v122 = vunpack.c.0.s8 %v121
    %v123 = vlaneseq
    %v124 = vshrl.u32 %v123, 7
    %v125 = vsub.s32 %v122, %v124
    %v126 = vrot.slane %v98, %v125
    %v127 = vcombine.low %v105, %v119
    %v128 = vcombine.high %v105, %v119
    %v129 = vcombine.low %v112, %v126
    %v130 = vcombine.high %v112, %v126
    %v131 = vcombine.low %v64, %v66
    %v132 = vcombine.high %v64, %v66
    %v133 = vcombine.low %v68, %v70
    %v134 = vcombine.high %v68, %v70
    %v136 = vunpack.c.l.s4 1983009808
    %v137 = vunpack.c.0.s8 %v136
    %v138 = vlaneseq
    %v139 = vshrl.u32 %v138, 7
    %v140 = vsub.s32 %v137, %v139
    %v141 = vrot.slane %v131, %v140
    %v143 = vunpack.c.l.s4 1983009808
    %v144 = vunpack.c.0.s8 %v143
    %v145 = vlaneseq
    %v146 = vshrl.u32 %v145, 7
    %v147 = vsub.s32 %v144, %v146
    %v148 = vrot.slane %v132, %v147
    %v150 = vunpack.c.l.s4 1983009808
    %v151 = vunpack.c.0.s8 %v150
    %v152 = vlaneseq
    %v153 = vshrl.u32 %v152, 7
    %v154 = vsub.s32 %v151, %v153
    %v155 = vrot.slane %v133, %v154
    %v157 = vunpack.c.l.s4 1983009808
    %v158 = vunpack.c.0.s8 %v157
    %v159 = vlaneseq
    %v160 = vshrl.u32 %v159, 7
    %v161 = vsub.s32 %v158, %v160
    %v162 = vrot.slane %v134, %v161
    %v163 = vcombine.low %v141, %v155
    %v164 = vcombine.high %v141, %v155
    %v165 = vcombine.low %v148, %v162
    %v166 = vcombine.high %v148, %v162
    %v167 = vcombine.low %v71, %v73
    %v168 = vcombine.high %v71, %v73
    %v169 = vcombine.low %v75, %v77
    %v170 = vcombine.high %v75, %v77
    %v172 = vunpack.c.l.s4 1983009808
    %v173 = vunpack.c.0.s8 %v172
    %v174 = vlaneseq
    %v175 = vshrl.u32 %v174, 7
    %v176 = vsub.s32 %v173, %v175
    %v177 = vrot.slane %v167, %v176
    %v179 = vunpack.c.l.s4 1983009808
    %v180 = vunpack.c.0.s8 %v179
    %v181 = vlaneseq
    %v182 = vshrl.u32 %v181, 7
    %v183 = vsub.s32 %v180, %v182
    %v184 = vrot.slane %v168, %v183
    %v186 = vunpack.c.l.s4 1983009808
    %v187 = vunpack.c.0.s8 %v186
    %v188 = vlaneseq
    %v189 = vshrl.u32 %v188, 7
    %v190 = vsub.s32 %v187, %v189
    %v191 = vrot.slane %v169, %v190
    %v193 = vunpack.c.l.s4 1983009808
    %v194 = vunpack.c.0.s8 %v193
    %v195 = vlaneseq
    %v196 = vshrl.u32 %v195, 7
    %v197 = vsub.s32 %v194, %v196
    %v198 = vrot.slane %v170, %v197
    %v199 = vcombine.low %v177, %v191
    %v200 = vcombine.high %v177, %v191
    %v201 = vcombine.low %v184, %v198
    %v202 = vcombine.high %v184, %v198
    %v203 = vcombine.low %v72, %v74
    %v204 = vcombine.high %v72, %v74
    %v205 = vcombine.low %v76, %v78
    %v206 = vcombine.high %v76, %v78
    %v208 = vunpack.c.l.s4 1983009808
    %v209 = vunpack.c.0.s8 %v208
    %v210 = vlaneseq
    %v211 = vshrl.u32 %v210, 7
    %v212 = vsub.s32 %v209, %v211
    %v213 = vrot.slane %v203, %v212
    %v215 = vunpack.c.l.s4 1983009808
    %v216 = vunpack.c.0.s8 %v215
    %v217 = vlaneseq
    %v218 = vshrl.u32 %v217, 7
    %v219 = vsub.s32 %v216, %v218
    %v220 = vrot.slane %v204, %v219
    %v222 = vunpack.c.l.s4 1983009808
    %v223 = vunpack.c.0.s8 %v222
    %v224 = vlaneseq
    %v225 = vshrl.u32 %v224, 7
    %v226 = vsub.s32 %v223, %v225
    %v227 = vrot.slane %v205, %v226
    %v229 = vunpack.c.l.s4 1983009808
    %v230 = vunpack.c.0.s8 %v229
    %v231 = vlaneseq
    %v232 = vshrl.u32 %v231, 7
    %v233 = vsub.s32 %v230, %v232
    %v234 = vrot.slane %v206, %v233
    %v235 = vcombine.low %v213, %v227
    %v236 = vcombine.high %v213, %v227
    %v237 = vcombine.low %v220, %v234
    %v238 = vcombine.high %v220, %v234
    %v255 = vpack.c.bf16 %v199, %v127
    %v256 = vpack.c.bf16 %v200, %v128
    %v257 = vpack.c.bf16 %v201, %v129
    %v258 = vpack.c.bf16 %v202, %v130
    %v259 = vpack.c.bf16 %v235, %v163
    %v260 = vpack.c.bf16 %v236, %v164
    %v261 = vpack.c.bf16 %v237, %v165
    %v262 = vpack.c.bf16 %v238, %v166
    %v263 = vld [vmem:[#allocation6] sm:$0xf]
    %v264 = vld [vmem:[#allocation6 + $0x4] sm:$0xf]
    %v265 = vld [vmem:[#allocation6 + $0x8] sm:$0xf]
    %v266 = vld [vmem:[#allocation6 + $0xc] sm:$0xf]
    %v267 = vld [vmem:[#allocation6 + $0x10] sm:$0xf]
    %v268 = vld [vmem:[#allocation6 + $0x14] sm:$0xf]
    %v269 = vld [vmem:[#allocation6 + $0x18] sm:$0xf]
    %v270 = vld [vmem:[#allocation6 + $0x1c] sm:$0xf]
    %v271 = vld [vmem:[#allocation6 + $0x20] sm:$0xf]
    %v272 = vld [vmem:[#allocation6 + $0x24] sm:$0xf]
    %v273 = vld [vmem:[#allocation6 + $0x28] sm:$0xf]
    %v274 = vld [vmem:[#allocation6 + $0x2c] sm:$0xf]
    %v275 = vld [vmem:[#allocation6 + $0x30] sm:$0xf]
    %v276 = vld [vmem:[#allocation6 + $0x34] sm:$0xf]
    %v277 = vld [vmem:[#allocation6 + $0x38] sm:$0xf]
    %v278 = vld [vmem:[#allocation6 + $0x3c] sm:$0xf]
    %v279 = vld [vmem:[#allocation6 + $0x40] sm:$0xf]
    %v280 = vld [vmem:[#allocation6 + $0x44] sm:$0xf]
    %v281 = vld [vmem:[#allocation6 + $0x48] sm:$0xf]
    %v282 = vld [vmem:[#allocation6 + $0x4c] sm:$0xf]
    %v283 = vld [vmem:[#allocation6 + $0x50] sm:$0xf]
    %v284 = vld [vmem:[#allocation6 + $0x54] sm:$0xf]
    %v285 = vld [vmem:[#allocation6 + $0x58] sm:$0xf]
    %v286 = vld [vmem:[#allocation6 + $0x5c] sm:$0xf]
    %v287 = vld [vmem:[#allocation6 + $0x60] sm:$0xf]
    %v288 = vld [vmem:[#allocation6 + $0x64] sm:$0xf]
    %v289 = vld [vmem:[#allocation6 + $0x68] sm:$0xf]
    %v290 = vld [vmem:[#allocation6 + $0x6c] sm:$0xf]
    %v291 = vld [vmem:[#allocation6 + $0x70] sm:$0xf]
    %v292 = vld [vmem:[#allocation6 + $0x74] sm:$0xf]
    %v293 = vld [vmem:[#allocation6 + $0x78] sm:$0xf]
    %v294 = vld [vmem:[#allocation6 + $0x7c] sm:$0xf]
    %v295 = vld [vmem:[#allocation6 + $0x80] sm:$0xf]
    %v296 = vld [vmem:[#allocation6 + $0x84] sm:$0xf]
    %v297 = vld [vmem:[#allocation6 + $0x88] sm:$0xf]
    %v298 = vld [vmem:[#allocation6 + $0x8c] sm:$0xf]
    %v299 = vld [vmem:[#allocation6 + $0x90] sm:$0xf]
    %v300 = vld [vmem:[#allocation6 + $0x94] sm:$0xf]
    %v301 = vld [vmem:[#allocation6 + $0x98] sm:$0xf]
    %v302 = vld [vmem:[#allocation6 + $0x9c] sm:$0xf]
    %v303 = vld [vmem:[#allocation6 + $0xa0] sm:$0xf]
    %v304 = vld [vmem:[#allocation6 + $0xa4] sm:$0xf]
    %v305 = vld [vmem:[#allocation6 + $0xa8] sm:$0xf]
    %v306 = vld [vmem:[#allocation6 + $0xac] sm:$0xf]
    %v307 = vld [vmem:[#allocation6 + $0xb0] sm:$0xf]
    %v308 = vld [vmem:[#allocation6 + $0xb4] sm:$0xf]
    %v309 = vld [vmem:[#allocation6 + $0xb8] sm:$0xf]
    %v310 = vld [vmem:[#allocation6 + $0xbc] sm:$0xf]
    %v311 = vld [vmem:[#allocation6 + $0xc0] sm:$0xf]
    %v312 = vld [vmem:[#allocation6 + $0xc4] sm:$0xf]
    %v313 = vld [vmem:[#allocation6 + $0xc8] sm:$0xf]
    %v314 = vld [vmem:[#allocation6 + $0xcc] sm:$0xf]
    %v315 = vld [vmem:[#allocation6 + $0xd0] sm:$0xf]
    %v316 = vld [vmem:[#allocation6 + $0xd4] sm:$0xf]
    %v317 = vld [vmem:[#allocation6 + $0xd8] sm:$0xf]
    %v318 = vld [vmem:[#allocation6 + $0xdc] sm:$0xf]
    %v319 = vld [vmem:[#allocation6 + $0xe0] sm:$0xf]
    %v320 = vld [vmem:[#allocation6 + $0xe4] sm:$0xf]
    %v321 = vld [vmem:[#allocation6 + $0xe8] sm:$0xf]
    %v322 = vld [vmem:[#allocation6 + $0xec] sm:$0xf]
    %v323 = vld [vmem:[#allocation6 + $0xf0] sm:$0xf]
    %v324 = vld [vmem:[#allocation6 + $0xf4] sm:$0xf]
    %v325 = vld [vmem:[#allocation6 + $0xf8] sm:$0xf]
    %v326 = vld [vmem:[#allocation6 + $0xfc] sm:$0xf]
    %v327 = vld [vmem:[#allocation6 + $0x100] sm:$0xf]
    %v328 = vld [vmem:[#allocation6 + $0x104] sm:$0xf]
    %v329 = vld [vmem:[#allocation6 + $0x108] sm:$0xf]
    %v330 = vld [vmem:[#allocation6 + $0x10c] sm:$0xf]
    %v331 = vld [vmem:[#allocation6 + $0x110] sm:$0xf]
    %v332 = vld [vmem:[#allocation6 + $0x114] sm:$0xf]
    %v333 = vld [vmem:[#allocation6 + $0x118] sm:$0xf]
    %v334 = vld [vmem:[#allocation6 + $0x11c] sm:$0xf]
    %v335 = vld [vmem:[#allocation6 + $0x120] sm:$0xf]
    %v336 = vld [vmem:[#allocation6 + $0x124] sm:$0xf]
    %v337 = vld [vmem:[#allocation6 + $0x128] sm:$0xf]
    %v338 = vld [vmem:[#allocation6 + $0x12c] sm:$0xf]
    %v339 = vld [vmem:[#allocation6 + $0x130] sm:$0xf]
    %v340 = vld [vmem:[#allocation6 + $0x134] sm:$0xf]
    %v341 = vld [vmem:[#allocation6 + $0x138] sm:$0xf]
    %v342 = vld [vmem:[#allocation6 + $0x13c] sm:$0xf]
    %v343 = vld [vmem:[#allocation6 + $0x140] sm:$0xf]
    %v344 = vld [vmem:[#allocation6 + $0x144] sm:$0xf]
    %v345 = vld [vmem:[#allocation6 + $0x148] sm:$0xf]
    %v346 = vld [vmem:[#allocation6 + $0x14c] sm:$0xf]
    %v347 = vld [vmem:[#allocation6 + $0x150] sm:$0xf]
    %v348 = vld [vmem:[#allocation6 + $0x154] sm:$0xf]
    %v349 = vld [vmem:[#allocation6 + $0x158] sm:$0xf]
    %v350 = vld [vmem:[#allocation6 + $0x15c] sm:$0xf]
    %v351 = vld [vmem:[#allocation6 + $0x160] sm:$0xf]
    %v352 = vld [vmem:[#allocation6 + $0x164] sm:$0xf]
    %v353 = vld [vmem:[#allocation6 + $0x168] sm:$0xf]
    %v354 = vld [vmem:[#allocation6 + $0x16c] sm:$0xf]
    %v355 = vld [vmem:[#allocation6 + $0x170] sm:$0xf]
    %v356 = vld [vmem:[#allocation6 + $0x174] sm:$0xf]
    %v357 = vld [vmem:[#allocation6 + $0x178] sm:$0xf]
    %v358 = vld [vmem:[#allocation6 + $0x17c] sm:$0xf]
    %v359 = vld [vmem:[#allocation6 + $0x180] sm:$0xf]
    %v360 = vld [vmem:[#allocation6 + $0x184] sm:$0xf]
    %v361 = vld [vmem:[#allocation6 + $0x188] sm:$0xf]
    %v362 = vld [vmem:[#allocation6 + $0x18c] sm:$0xf]
    %v363 = vld [vmem:[#allocation6 + $0x190] sm:$0xf]
    %v364 = vld [vmem:[#allocation6 + $0x194] sm:$0xf]
    %v365 = vld [vmem:[#allocation6 + $0x198] sm:$0xf]
    %v366 = vld [vmem:[#allocation6 + $0x19c] sm:$0xf]
    %v367 = vld [vmem:[#allocation6 + $0x1a0] sm:$0xf]
    %v368 = vld [vmem:[#allocation6 + $0x1a4] sm:$0xf]
    %v369 = vld [vmem:[#allocation6 + $0x1a8] sm:$0xf]
    %v370 = vld [vmem:[#allocation6 + $0x1ac] sm:$0xf]
    %v371 = vld [vmem:[#allocation6 + $0x1b0] sm:$0xf]
    %v372 = vld [vmem:[#allocation6 + $0x1b4] sm:$0xf]
    %v373 = vld [vmem:[#allocation6 + $0x1b8] sm:$0xf]
    %v374 = vld [vmem:[#allocation6 + $0x1bc] sm:$0xf]
    %v375 = vld [vmem:[#allocation6 + $0x1c0] sm:$0xf]
    %v376 = vld [vmem:[#allocation6 + $0x1c4] sm:$0xf]
    %v377 = vld [vmem:[#allocation6 + $0x1c8] sm:$0xf]
    %v378 = vld [vmem:[#allocation6 + $0x1cc] sm:$0xf]
    %v379 = vld [vmem:[#allocation6 + $0x1d0] sm:$0xf]
    %v380 = vld [vmem:[#allocation6 + $0x1d4] sm:$0xf]
    %v381 = vld [vmem:[#allocation6 + $0x1d8] sm:$0xf]
    %v382 = vld [vmem:[#allocation6 + $0x1dc] sm:$0xf]
    %v383 = vld [vmem:[#allocation6 + $0x1e0] sm:$0xf]
    %v384 = vld [vmem:[#allocation6 + $0x1e4] sm:$0xf]
    %v385 = vld [vmem:[#allocation6 + $0x1e8] sm:$0xf]
    %v386 = vld [vmem:[#allocation6 + $0x1ec] sm:$0xf]
    %v387 = vld [vmem:[#allocation6 + $0x1f0] sm:$0xf]
    %v388 = vld [vmem:[#allocation6 + $0x1f4] sm:$0xf]
    %v389 = vld [vmem:[#allocation6 + $0x1f8] sm:$0xf]
    %v390 = vld [vmem:[#allocation6 + $0x1fc] sm:$0xf]
    %v391 = vld [vmem:[%s2] sm:$0x1]
    %v393 = vlaneseq
    %v394 = vshrl.u32 %v393, 7
    %v395 = vsub.s32 0, %v394
    %v396 = vrot.slane %v391, %v395
    %v526 = vunpack.c.l.b16 %v263
    %v527 = vunpack.c.l.b16 %v264
    %v528 = vunpack.c.l.b16 %v265
    %v529 = vunpack.c.l.b16 %v266
    %v530 = vunpack.c.l.b16 %v267
    %v531 = vunpack.c.l.b16 %v268
    %v532 = vunpack.c.l.b16 %v269
    %v533 = vunpack.c.l.b16 %v270
    %v534 = vunpack.c.l.b16 %v271
    %v535 = vunpack.c.l.b16 %v272
    %v536 = vunpack.c.l.b16 %v273
    %v537 = vunpack.c.l.b16 %v274
    %v538 = vunpack.c.l.b16 %v275
    %v539 = vunpack.c.l.b16 %v276
    %v540 = vunpack.c.l.b16 %v277
    %v541 = vunpack.c.l.b16 %v278
    %v542 = vunpack.c.l.b16 %v279
    %v543 = vunpack.c.l.b16 %v280
    %v544 = vunpack.c.l.b16 %v281
    %v545 = vunpack.c.l.b16 %v282
    %v546 = vunpack.c.l.b16 %v283
    %v547 = vunpack.c.l.b16 %v284
    %v548 = vunpack.c.l.b16 %v285
    %v549 = vunpack.c.l.b16 %v286
    %v550 = vunpack.c.l.b16 %v287
    %v551 = vunpack.c.l.b16 %v288
    %v552 = vunpack.c.l.b16 %v289
    %v553 = vunpack.c.l.b16 %v290
    %v554 = vunpack.c.l.b16 %v291
    %v555 = vunpack.c.l.b16 %v292
    %v556 = vunpack.c.l.b16 %v293
    %v557 = vunpack.c.l.b16 %v294
    %v558 = vunpack.c.l.b16 %v295
    %v559 = vunpack.c.l.b16 %v296
    %v560 = vunpack.c.l.b16 %v297
    %v561 = vunpack.c.l.b16 %v298
    %v562 = vunpack.c.l.b16 %v299
    %v563 = vunpack.c.l.b16 %v300
    %v564 = vunpack.c.l.b16 %v301
    %v565 = vunpack.c.l.b16 %v302
    %v566 = vunpack.c.l.b16 %v303
    %v567 = vunpack.c.l.b16 %v304
    %v568 = vunpack.c.l.b16 %v305
    %v569 = vunpack.c.l.b16 %v306
    %v570 = vunpack.c.l.b16 %v307
    %v571 = vunpack.c.l.b16 %v308
    %v572 = vunpack.c.l.b16 %v309
    %v573 = vunpack.c.l.b16 %v310
    %v574 = vunpack.c.l.b16 %v311
    %v575 = vunpack.c.l.b16 %v312
    %v576 = vunpack.c.l.b16 %v313
    %v577 = vunpack.c.l.b16 %v314
    %v578 = vunpack.c.l.b16 %v315
    %v579 = vunpack.c.l.b16 %v316
    %v580 = vunpack.c.l.b16 %v317
    %v581 = vunpack.c.l.b16 %v318
    %v582 = vunpack.c.l.b16 %v319
    %v583 = vunpack.c.l.b16 %v320
    %v584 = vunpack.c.l.b16 %v321
    %v585 = vunpack.c.l.b16 %v322
    %v586 = vunpack.c.l.b16 %v323
    %v587 = vunpack.c.l.b16 %v324
    %v588 = vunpack.c.l.b16 %v325
    %v589 = vunpack.c.l.b16 %v326
    %v590 = vunpack.c.l.b16 %v327
    %v591 = vunpack.c.l.b16 %v328
    %v592 = vunpack.c.l.b16 %v329
    %v593 = vunpack.c.l.b16 %v330
    %v594 = vunpack.c.l.b16 %v331
    %v595 = vunpack.c.l.b16 %v332
    %v596 = vunpack.c.l.b16 %v333
    %v597 = vunpack.c.l.b16 %v334
    %v598 = vunpack.c.l.b16 %v335
    %v599 = vunpack.c.l.b16 %v336
    %v600 = vunpack.c.l.b16 %v337
    %v601 = vunpack.c.l.b16 %v338
    %v602 = vunpack.c.l.b16 %v339
    %v603 = vunpack.c.l.b16 %v340
    %v604 = vunpack.c.l.b16 %v341
    %v605 = vunpack.c.l.b16 %v342
    %v606 = vunpack.c.l.b16 %v343
    %v607 = vunpack.c.l.b16 %v344
    %v608 = vunpack.c.l.b16 %v345
    %v609 = vunpack.c.l.b16 %v346
    %v610 = vunpack.c.l.b16 %v347
    %v611 = vunpack.c.l.b16 %v348
    %v612 = vunpack.c.l.b16 %v349
    %v613 = vunpack.c.l.b16 %v350
    %v614 = vunpack.c.l.b16 %v351
    %v615 = vunpack.c.l.b16 %v352
    %v616 = vunpack.c.l.b16 %v353
    %v617 = vunpack.c.l.b16 %v354
    %v618 = vunpack.c.l.b16 %v355
    %v619 = vunpack.c.l.b16 %v356
    %v620 = vunpack.c.l.b16 %v357
    %v621 = vunpack.c.l.b16 %v358
    %v622 = vunpack.c.l.b16 %v359
    %v623 = vunpack.c.l.b16 %v360
    %v624 = vunpack.c.l.b16 %v361
    %v625 = vunpack.c.l.b16 %v362
    %v626 = vunpack.c.l.b16 %v363
    %v627 = vunpack.c.l.b16 %v364
    %v628 = vunpack.c.l.b16 %v365
    %v629 = vunpack.c.l.b16 %v366
    %v630 = vunpack.c.l.b16 %v367
    %v631 = vunpack.c.l.b16 %v368
    %v632 = vunpack.c.l.b16 %v369
    %v633 = vunpack.c.l.b16 %v370
    %v634 = vunpack.c.l.b16 %v371
    %v635 = vunpack.c.l.b16 %v372
    %v636 = vunpack.c.l.b16 %v373
    %v637 = vunpack.c.l.b16 %v374
    %v638 = vunpack.c.l.b16 %v375
    %v639 = vunpack.c.l.b16 %v376
    %v640 = vunpack.c.l.b16 %v377
    %v641 = vunpack.c.l.b16 %v378
    %v642 = vunpack.c.l.b16 %v379
    %v643 = vunpack.c.l.b16 %v380
    %v644 = vunpack.c.l.b16 %v381
    %v645 = vunpack.c.l.b16 %v382
    %v646 = vunpack.c.l.b16 %v383
    %v647 = vunpack.c.l.b16 %v384
    %v648 = vunpack.c.l.b16 %v385
    %v649 = vunpack.c.l.b16 %v386
    %v650 = vunpack.c.l.b16 %v387
    %v651 = vunpack.c.l.b16 %v388
    %v652 = vunpack.c.l.b16 %v389
    %v653 = vunpack.c.l.b16 %v390
    %v654 = vpack.c.b16 %v527, %v526
    %v655 = vpack.c.b16 %v529, %v528
    %v656 = vpack.c.b16 %v531, %v530
    %v657 = vpack.c.b16 %v533, %v532
    %v658 = vpack.c.b16 %v535, %v534
    %v659 = vpack.c.b16 %v537, %v536
    %v660 = vpack.c.b16 %v539, %v538
    %v661 = vpack.c.b16 %v541, %v540
    %v662 = vpack.c.b16 %v543, %v542
    %v663 = vpack.c.b16 %v545, %v544
    %v664 = vpack.c.b16 %v547, %v546
    %v665 = vpack.c.b16 %v549, %v548
    %v666 = vpack.c.b16 %v551, %v550
    %v667 = vpack.c.b16 %v553, %v552
    %v668 = vpack.c.b16 %v555, %v554
    %v669 = vpack.c.b16 %v557, %v556
    %v670 = vpack.c.b16 %v559, %v558
    %v671 = vpack.c.b16 %v561, %v560
    %v672 = vpack.c.b16 %v563, %v562
    %v673 = vpack.c.b16 %v565, %v564
    %v674 = vpack.c.b16 %v567, %v566
    %v675 = vpack.c.b16 %v569, %v568
    %v676 = vpack.c.b16 %v571, %v570
    %v677 = vpack.c.b16 %v573, %v572
    %v678 = vpack.c.b16 %v575, %v574
    %v679 = vpack.c.b16 %v577, %v576
    %v680 = vpack.c.b16 %v579, %v578
    %v681 = vpack.c.b16 %v581, %v580
    %v682 = vpack.c.b16 %v583, %v582
    %v683 = vpack.c.b16 %v585, %v584
    %v684 = vpack.c.b16 %v587, %v586
    %v685 = vpack.c.b16 %v589, %v588
    %v686 = vpack.c.b16 %v591, %v590
    %v687 = vpack.c.b16 %v593, %v592
    %v688 = vpack.c.b16 %v595, %v594
    %v689 = vpack.c.b16 %v597, %v596
    %v690 = vpack.c.b16 %v599, %v598
    %v691 = vpack.c.b16 %v601, %v600
    %v692 = vpack.c.b16 %v603, %v602
    %v693 = vpack.c.b16 %v605, %v604
    %v694 = vpack.c.b16 %v607, %v606
    %v695 = vpack.c.b16 %v609, %v608
    %v696 = vpack.c.b16 %v611, %v610
    %v697 = vpack.c.b16 %v613, %v612
    %v698 = vpack.c.b16 %v615, %v614
    %v699 = vpack.c.b16 %v617, %v616
    %v700 = vpack.c.b16 %v619, %v618
    %v701 = vpack.c.b16 %v621, %v620
    %v702 = vpack.c.b16 %v623, %v622
    %v703 = vpack.c.b16 %v625, %v624
    %v704 = vpack.c.b16 %v627, %v626
    %v705 = vpack.c.b16 %v629, %v628
    %v706 = vpack.c.b16 %v631, %v630
    %v707 = vpack.c.b16 %v633, %v632
    %v708 = vpack.c.b16 %v635, %v634
    %v709 = vpack.c.b16 %v637, %v636
    %v710 = vpack.c.b16 %v639, %v638
    %v711 = vpack.c.b16 %v641, %v640
    %v712 = vpack.c.b16 %v643, %v642
    %v713 = vpack.c.b16 %v645, %v644
    %v714 = vpack.c.b16 %v647, %v646
    %v715 = vpack.c.b16 %v649, %v648
    %v716 = vpack.c.b16 %v651, %v650
    %v717 = vpack.c.b16 %v653, %v652
    %782 = vmatprep.subr.bf16.mxu0 0
    %783 = vmatpush1.bf16.msra.mxu0 %v661
    %784 = vmatprep.subr.bf16.mxu0 0
    %785 = vmatpush1.bf16.msra.mxu0 %v660
    %786 = vmatprep.subr.bf16.mxu0 0
    %787 = vmatpush1.bf16.msra.mxu0 %v659
    %788 = vmatprep.subr.bf16.mxu0 0
    %789 = vmatpush1.bf16.msra.mxu0 %v658
    %790 = vmatprep.subr.bf16.mxu0 0
    %791 = vmatpush1.bf16.msra.mxu0 %v657
    %792 = vmatprep.subr.bf16.mxu0 0
    %793 = vmatpush1.bf16.msra.mxu0 %v656
    %794 = vmatprep.subr.bf16.mxu0 0
    %795 = vmatpush1.bf16.msra.mxu0 %v655
    %796 = vmatprep.subr.bf16.mxu0 0
    %797 = vmatpush1.bf16.msra.mxu0 %v654
    %798 = vmatprep.subr.bf16.mxu0 0
    %799 = vmatpush2.bf16.msra.mxu0 %v669
    %800 = vmatprep.subr.bf16.mxu0 0
    %801 = vmatpush2.bf16.msra.mxu0 %v668
    %802 = vmatprep.subr.bf16.mxu0 0
    %803 = vmatpush2.bf16.msra.mxu0 %v667
    %804 = vmatprep.subr.bf16.mxu0 0
    %805 = vmatpush2.bf16.msra.mxu0 %v666
    %806 = vmatprep.subr.bf16.mxu0 0
    %807 = vmatpush2.bf16.msra.mxu0 %v665
    %808 = vmatprep.subr.bf16.mxu0 0
    %809 = vmatpush2.bf16.msra.mxu0 %v664
    %810 = vmatprep.subr.bf16.mxu0 0
    %811 = vmatpush2.bf16.msra.mxu0 %v663
    %812 = vmatprep.subr.bf16.mxu0 0
    %813 = vmatpush2.bf16.msra.mxu0 %v662
    %814 = vmatprep.mubr.bf16.mxu0 %v256
    %815 = vmatmul.mubr.bf16.gmra.mxu0 %v255
    %v816 = vpop.f32.mrf.mxu0
    %v817 = vadd.f32 %v396, %v816
    %v818 = vpop.f32.mrf.mxu0
    %v819 = vpop.f32.mrf.mxu0
    %v820 = vadd.f32 %v396, %v819
    %v821 = vpop.f32.mrf.mxu0
    %822 = vdwg.mxu0
    %823 = vmatprep.subr.bf16.mxu0 0
    %824 = vmatpush1.bf16.msra.mxu0 %v677
    %825 = vmatprep.subr.bf16.mxu0 0
    %826 = vmatpush1.bf16.msra.mxu0 %v676
    %827 = vmatprep.subr.bf16.mxu0 0
    %828 = vmatpush1.bf16.msra.mxu0 %v675
    %829 = vmatprep.subr.bf16.mxu0 0
    %830 = vmatpush1.bf16.msra.mxu0 %v674
    %831 = vmatprep.subr.bf16.mxu0 0
    %832 = vmatpush1.bf16.msra.mxu0 %v673
    %833 = vmatprep.subr.bf16.mxu0 0
    %834 = vmatpush1.bf16.msra.mxu0 %v672
    %835 = vmatprep.subr.bf16.mxu0 0
    %836 = vmatpush1.bf16.msra.mxu0 %v671
    %837 = vmatprep.subr.bf16.mxu0 0
    %838 = vmatpush1.bf16.msra.mxu0 %v670
    %839 = vmatprep.subr.bf16.mxu0 0
    %840 = vmatpush2.bf16.msra.mxu0 %v685
    %841 = vmatprep.subr.bf16.mxu0 0
    %842 = vmatpush2.bf16.msra.mxu0 %v684
    %843 = vmatprep.subr.bf16.mxu0 0
    %844 = vmatpush2.bf16.msra.mxu0 %v683
    %845 = vmatprep.subr.bf16.mxu0 0
    %846 = vmatpush2.bf16.msra.mxu0 %v682
    %847 = vmatprep.subr.bf16.mxu0 0
    %848 = vmatpush2.bf16.msra.mxu0 %v681
    %849 = vmatprep.subr.bf16.mxu0 0
    %850 = vmatpush2.bf16.msra.mxu0 %v680
    %851 = vmatprep.subr.bf16.mxu0 0
    %852 = vmatpush2.bf16.msra.mxu0 %v679
    %853 = vmatprep.subr.bf16.mxu0 0
    %854 = vmatpush2.bf16.msra.mxu0 %v678
    %855 = vmatprep.mubr.bf16.mxu0 %v258
    %856 = vmatmul.mubr.bf16.gmra.mxu0 %v257
    %v857 = vpop.f32.mrf.mxu0
    %v858 = vadd.f32 %v817, %v857
    %v859 = vpop.f32.mrf.mxu0
    %v860 = vpop.f32.mrf.mxu0
    %v861 = vadd.f32 %v820, %v860
    %v862 = vpop.f32.mrf.mxu0
    %863 = vdwg.mxu0
    %864 = vmatprep.subr.bf16.mxu0 0
    %865 = vmatpush1.bf16.msra.mxu0 %v693
    %866 = vmatprep.subr.bf16.mxu0 0
    %867 = vmatpush1.bf16.msra.mxu0 %v692
    %868 = vmatprep.subr.bf16.mxu0 0
    %869 = vmatpush1.bf16.msra.mxu0 %v691
    %870 = vmatprep.subr.bf16.mxu0 0
    %871 = vmatpush1.bf16.msra.mxu0 %v690
    %872 = vmatprep.subr.bf16.mxu0 0
    %873 = vmatpush1.bf16.msra.mxu0 %v689
    %874 = vmatprep.subr.bf16.mxu0 0
    %875 = vmatpush1.bf16.msra.mxu0 %v688
    %876 = vmatprep.subr.bf16.mxu0 0
    %877 = vmatpush1.bf16.msra.mxu0 %v687
    %878 = vmatprep.subr.bf16.mxu0 0
    %879 = vmatpush1.bf16.msra.mxu0 %v686
    %880 = vmatprep.subr.bf16.mxu0 0
    %881 = vmatpush2.bf16.msra.mxu0 %v701
    %882 = vmatprep.subr.bf16.mxu0 0
    %883 = vmatpush2.bf16.msra.mxu0 %v700
    %884 = vmatprep.subr.bf16.mxu0 0
    %885 = vmatpush2.bf16.msra.mxu0 %v699
    %886 = vmatprep.subr.bf16.mxu0 0
    %887 = vmatpush2.bf16.msra.mxu0 %v698
    %888 = vmatprep.subr.bf16.mxu0 0
    %889 = vmatpush2.bf16.msra.mxu0 %v697
    %890 = vmatprep.subr.bf16.mxu0 0
    %891 = vmatpush2.bf16.msra.mxu0 %v696
    %892 = vmatprep.subr.bf16.mxu0 0
    %893 = vmatpush2.bf16.msra.mxu0 %v695
    %894 = vmatprep.subr.bf16.mxu0 0
    %895 = vmatpush2.bf16.msra.mxu0 %v694
    %896 = vmatprep.mubr.bf16.mxu0 %v260
    %897 = vmatmul.mubr.bf16.gmra.mxu0 %v259
    %v898 = vpop.f32.mrf.mxu0
    %v899 = vadd.f32 %v858, %v898
    %v900 = vpop.f32.mrf.mxu0
    %v901 = vpop.f32.mrf.mxu0
    %v902 = vadd.f32 %v861, %v901
    %v903 = vpop.f32.mrf.mxu0
    %904 = vdwg.mxu0
    %905 = vmatprep.subr.bf16.mxu0 0
    %906 = vmatpush1.bf16.msra.mxu0 %v709
    %907 = vmatprep.subr.bf16.mxu0 0
    %908 = vmatpush1.bf16.msra.mxu0 %v708
    %909 = vmatprep.subr.bf16.mxu0 0
    %910 = vmatpush1.bf16.msra.mxu0 %v707
    %911 = vmatprep.subr.bf16.mxu0 0
    %912 = vmatpush1.bf16.msra.mxu0 %v706
    %913 = vmatprep.subr.bf16.mxu0 0
    %914 = vmatpush1.bf16.msra.mxu0 %v705
    %915 = vmatprep.subr.bf16.mxu0 0
    %916 = vmatpush1.bf16.msra.mxu0 %v704
    %917 = vmatprep.subr.bf16.mxu0 0
    %918 = vmatpush1.bf16.msra.mxu0 %v703
    %919 = vmatprep.subr.bf16.mxu0 0
    %920 = vmatpush1.bf16.msra.mxu0 %v702
    %921 = vmatprep.subr.bf16.mxu0 0
    %922 = vmatpush2.bf16.msra.mxu0 %v717
    %923 = vmatprep.subr.bf16.mxu0 0
    %924 = vmatpush2.bf16.msra.mxu0 %v716
    %925 = vmatprep.subr.bf16.mxu0 0
    %926 = vmatpush2.bf16.msra.mxu0 %v715
    %927 = vmatprep.subr.bf16.mxu0 0
    %928 = vmatpush2.bf16.msra.mxu0 %v714
    %929 = vmatprep.subr.bf16.mxu0 0
    %930 = vmatpush2.bf16.msra.mxu0 %v713
    %931 = vmatprep.subr.bf16.mxu0 0
    %932 = vmatpush2.bf16.msra.mxu0 %v712
    %933 = vmatprep.subr.bf16.mxu0 0
    %934 = vmatpush2.bf16.msra.mxu0 %v711
    %935 = vmatprep.subr.bf16.mxu0 0
    %936 = vmatpush2.bf16.msra.mxu0 %v710
    %937 = vmatprep.mubr.bf16.mxu0 %v262
    %938 = vmatmul.mubr.bf16.gmra.mxu0 %v261
    %v939 = vpop.f32.mrf.mxu0
    %v940 = vadd.f32 %v899, %v939
    %v941 = vpop.f32.mrf.mxu0
    %v942 = vpop.f32.mrf.mxu0
    %v943 = vadd.f32 %v902, %v942
    %v944 = vpop.f32.mrf.mxu0
    %945 = vdwg.mxu0
    %v946 = vmax.f32 %v940, 0.0
    %v947 = vmax.f32 %v943, 0.0
    %v948 = vpack.c.bf16 %v947, %v946
    %v950 = vunpack.c.l.b16 %v948
    %v951 = vunpack.c.h.b16 %v948
    %v952 = vpack.c.b16 %v950, %v950
    %v953 = vpack.c.b16 %v951, %v951
    %956 = vst [vmem:[#allocation2] sm:$0xf] %v952
    %957 = vst [vmem:[#allocation2 + $0x4] sm:$0xf] %v953
    %v958 = vld [vmem:[#allocation2] sm:$0xf]
    %v959 = vld [vmem:[#allocation2 + $0x4] sm:$0xf]
    %v960 = vld [vmem:[#allocation8] sm:$0xf]
    %v961 = vld [vmem:[#allocation8 + $0x4] sm:$0xf]
    %v962 = vld [vmem:[#allocation8 + $0x8] sm:$0xf]
    %v963 = vld [vmem:[#allocation8 + $0xc] sm:$0xf]
    %v964 = vld [vmem:[#allocation8 + $0x10] sm:$0xf]
    %v965 = vld [vmem:[#allocation8 + $0x14] sm:$0xf]
    %v966 = vld [vmem:[#allocation8 + $0x18] sm:$0xf]
    %v967 = vld [vmem:[#allocation8 + $0x1c] sm:$0xf]
    %v968 = vld [vmem:[#allocation8 + $0x20] sm:$0xf]
    %v969 = vld [vmem:[#allocation8 + $0x24] sm:$0xf]
    %v970 = vld [vmem:[#allocation8 + $0x28] sm:$0xf]
    %v971 = vld [vmem:[#allocation8 + $0x2c] sm:$0xf]
    %v972 = vld [vmem:[#allocation8 + $0x30] sm:$0xf]
    %v973 = vld [vmem:[#allocation8 + $0x34] sm:$0xf]
    %v974 = vld [vmem:[#allocation8 + $0x38] sm:$0xf]
    %v975 = vld [vmem:[#allocation8 + $0x3c] sm:$0xf]
    %v976 = vld [vmem:[%s4] sm:$0x1]
    %v978 = vlaneseq
    %v979 = vshrl.u32 %v978, 7
    %v980 = vsub.s32 0, %v979
    %v981 = vrot.slane %v976, %v980
    %v985 = vunpack.c.l.b16 %v958
    %v986 = vunpack.c.l.b16 %v959
    %v987 = vpack.c.b16 %v986, %v985
    %v1005 = vunpack.c.l.b16 %v960
    %v1006 = vunpack.c.l.b16 %v961
    %v1007 = vunpack.c.l.b16 %v962
    %v1008 = vunpack.c.l.b16 %v963
    %v1009 = vunpack.c.l.b16 %v964
    %v1010 = vunpack.c.l.b16 %v965
    %v1011 = vunpack.c.l.b16 %v966
    %v1012 = vunpack.c.l.b16 %v967
    %v1013 = vunpack.c.l.b16 %v968
    %v1014 = vunpack.c.l.b16 %v969
    %v1015 = vunpack.c.l.b16 %v970
    %v1016 = vunpack.c.l.b16 %v971
    %v1017 = vunpack.c.l.b16 %v972
    %v1018 = vunpack.c.l.b16 %v973
    %v1019 = vunpack.c.l.b16 %v974
    %v1020 = vunpack.c.l.b16 %v975
    %v1021 = vpack.c.b16 %v1006, %v1005
    %v1022 = vpack.c.b16 %v1008, %v1007
    %v1023 = vpack.c.b16 %v1010, %v1009
    %v1024 = vpack.c.b16 %v1012, %v1011
    %v1025 = vpack.c.b16 %v1014, %v1013
    %v1026 = vpack.c.b16 %v1016, %v1015
    %v1027 = vpack.c.b16 %v1018, %v1017
    %v1028 = vpack.c.b16 %v1020, %v1019
    %1037 = vmatprep.subr.bf16.mxu0 0
    %1038 = vmatpush1.bf16.msra.mxu0 %v1028
    %1039 = vmatprep.subr.bf16.mxu0 0
    %1040 = vmatpush1.bf16.msra.mxu0 %v1027
    %1041 = vmatprep.subr.bf16.mxu0 0
    %1042 = vmatpush1.bf16.msra.mxu0 %v1026
    %1043 = vmatprep.subr.bf16.mxu0 0
    %1044 = vmatpush1.bf16.msra.mxu0 %v1025
    %1045 = vmatprep.subr.bf16.mxu0 0
    %1046 = vmatpush1.bf16.msra.mxu0 %v1024
    %1047 = vmatprep.subr.bf16.mxu0 0
    %1048 = vmatpush1.bf16.msra.mxu0 %v1023
    %1049 = vmatprep.subr.bf16.mxu0 0
    %1050 = vmatpush1.bf16.msra.mxu0 %v1022
    %1051 = vmatprep.subr.bf16.mxu0 0
    %1052 = vmatpush1.bf16.msra.mxu0 %v1021
    %1053 = vmatprep.subr.bf16.mxu0 0
    %1054 = vmatpush2.bf16.msra.mxu0 0
    %1055 = vmatprep.subr.bf16.mxu0 0
    %1056 = vmatpush2.bf16.msra.mxu0 0
    %1057 = vmatprep.subr.bf16.mxu0 0
    %1058 = vmatpush2.bf16.msra.mxu0 0
    %1059 = vmatprep.subr.bf16.mxu0 0
    %1060 = vmatpush2.bf16.msra.mxu0 0
    %1061 = vmatprep.subr.bf16.mxu0 0
    %1062 = vmatpush2.bf16.msra.mxu0 0
    %1063 = vmatprep.subr.bf16.mxu0 0
    %1064 = vmatpush2.bf16.msra.mxu0 0
    %1065 = vmatprep.subr.bf16.mxu0 0
    %1066 = vmatpush2.bf16.msra.mxu0 0
    %1067 = vmatprep.subr.bf16.mxu0 0
    %1068 = vmatpush2.bf16.msra.mxu0 0
    %1069 = vmatprep.mubr.bf16.mxu0 0
    %1070 = vmatmul.mubr.bf16.gmra.mxu0 %v987
    %v1071 = vpop.f32.mrf.mxu0
    %v1072 = vadd.f32 %v981, %v1071
    %v1073 = vpop.f32.mrf.mxu0
    %v1074 = vpop.f32.mrf.mxu0
    %v1075 = vadd.f32 %v981, %v1074
    %v1076 = vpop.f32.mrf.mxu0
    %1077 = vdwg.mxu0
    %v1078 = vmax.f32 %v1072, 0.0
    %v1079 = vmax.f32 %v1075, 0.0
    %1080 = vst [vmem:[#allocation9] sm:$0xff] %v1078
    %1081 = vst [vmem:[#allocation9 + $0x8] sm:$0xff] %v1079
    // Predicated region
    $region34: #{tpu_custom_call.1} parent=1 // pred_check
      _
    $region35: #{tpu_custom_call.1} parent=1 // pred_check_branch
      %1083 = sbr.rel (0) target = $region37
    $region36: #{tpu_custom_call.1} parent=1 // pred_region
      %s1085 = ssub.s32 256, 32
      %1086 = vsyncadd [#allocation5], %s1085
      %s1087 = sshll.u32 [#allocation9], 4
      %s1088 = int_to_ptr.vmem [resolvable:$true] %s1087
      %1093 = dma.vmem_to_hbm [thread:$0]  %s1088, 32, %s5, [#allocation5], 32, 32, 2
    $region37: #{tpu_custom_call.1} parent=1 // pred_fallthru
      _
    // Predicated region
    $region38: #{tpu_custom_call.1} parent=1 // pred_check
      _
    $region39: #{tpu_custom_call.1} parent=1 // pred_check_branch
      %1095 = sbr.rel (0) target = $region41
    $region40: #{tpu_custom_call.1} parent=1 // pred_region
      %1096 = dma.done [#allocation5], 256
    $region41: #{tpu_custom_call.1} parent=1 // pred_fallthru
      _
    %1097 = vsyncpa [#allocation4], 1
    %1098 = vsyncpa [#allocation7], 1
    %1099 = vsyncpa [#allocation5], 1

// kernel: tpu_custom_call.1
$region0: #{tpu_custom_call.1}
  #allocation0 [shape = 'u32[]', space=smem, size = 0x4, offset = 0x4, fixed_abs, tag = 'smem constant byte address 0x4 - core index']
  #allocation1 [shape = 'u32[144,128]{1,0:T(1,128)}', space=vmem, size = 0x12000, scoped, tag = 'internal scratch']
  #allocation2 [shape = 'bf16[16,128]{1,0:T(8,128)(2,1)}', space=vmem, size = 0x1000, scoped, tag = 'scratch operand']
  %s0 = inlined_call_operand.hbm [shape: f32[2,1024], index: 0, kind: input, shape index: {}]
  %s1 = inlined_call_operand.hbm [shape: bf16[1024,128], index: 1, kind: input, shape index: {}]
  %s2 = inlined_call_operand.vmem [shape: f32[1,128], index: 2, kind: input, shape index: {}]
  %s3 = inlined_call_operand.hbm [shape: bf16[128,128], index: 3, kind: input, shape index: {}]
  %s4 = inlined_call_operand.vmem [shape: f32[1,128], index: 4, kind: input, shape index: {}]
  %s5 = inlined_call_operand.hbm [shape: f32[2,128], index: 5, kind: output, shape index: {}]
  %s6 = sld [smem:[#allocation0]]
  $region42: #{tpu_custom_call.1} parent=0
    _
  %s8 = ssub.s32 1, %s6
  %s9 = scalar_select 0, %s8, %s6
  $region1: #{tpu_custom_call.1} parent=0
    #allocation3 [shape = 'u8[65536]{0}', space=vmem, size = 0x10000, scoped, tag = 'input window, operand 0, single buffered']
    #allocation4 [shape = 's32[1]{0}', space=sflag, size = 0x4, scoped, tag = 'scoped memory for tpu_custom_call.1']
    #allocation5 [shape = 's32[1]{0}', space=sflag, size = 0x4, scoped, tag = 'scoped memory for tpu_custom_call.1']
    #allocation6 [shape = 'u8[262144]{0}', space=vmem, size = 0x40000, scoped, tag = 'input window, operand 1, single buffered']
    #allocation7 [shape = 's32[1]{0}', space=sflag, size = 0x4, scoped, tag = 'scoped memory for tpu_custom_call.1']
    #allocation8 [shape = 'u8[32768]{0}', space=vmem, size = 0x8000, scoped, tag = 'input window, operand 3, single buffered']
    #allocation9 [shape = 'u8[8192]{0}', space=vmem, size = 0x2000, scoped, tag = 'output window, operand 0, single buffered']
    %10 = vsyncpa [#allocation4], 0
    %11 = vsyncpa [#allocation7], 0
    %12 = vsyncpa [#allocation5], 0
    // Predicated region
    $region2: #{tpu_custom_call.1} parent=1 // pred_check
      _
    $region3: #{tpu_custom_call.1} parent=1 // pred_check_branch
      %14 = sbr.rel (0) target = $region5
    $region4: #{tpu_custom_call.1} parent=1 // pred_region
      %s16 = ssub.s32 2048, 256
      %17 = vsyncadd [#allocation4], %s16
      %s18 = sshll.u32 [#allocation3], 4
      %s19 = int_to_ptr.vmem [resolvable:$true] %s18
      %24 = dma.hbm_to_vmem [thread:$0]  %s0, 256, %s19, [#allocation4], 256, 256, 16
    $region5: #{tpu_custom_call.1} parent=1 // pred_fallthru
      _
    // Predicated region
    $region6: #{tpu_custom_call.1} parent=1 // pred_check
      _
    $region7: #{tpu_custom_call.1} parent=1 // pred_check_branch
      %26 = sbr.rel (0) target = $region9
    $region8: #{tpu_custom_call.1} parent=1 // pred_region
      %s28 = ssub.s32 8192, 8192
      %29 = vsyncadd [#allocation7], %s28
      %s30 = sshll.u32 [#allocation6], 4
      %s31 = int_to_ptr.vmem [resolvable:$true] %s30
      %36 = dma.hbm_to_vmem [thread:$0]  %s1, 8192, %s31, [#allocation7], 64, 64, 4
    $region9: #{tpu_custom_call.1} parent=1 // pred_fallthru
      _
    // Predicated region
    $region10: #{tpu_custom_call.1} parent=1 // pred_check
      _
    $region11: #{tpu_custom_call.1} parent=1 // pred_check_branch
      %38 = sbr.rel (0) target = $region13
    $region12: #{tpu_custom_call.1} parent=1 // pred_region
      _
    $region13: #{tpu_custom_call.1} parent=1 // pred_fallthru
      _
    // Predicated region
    $region14: #{tpu_custom_call.1} parent=1 // pred_check
      _
    $region15: #{tpu_custom_call.1} parent=1 // pred_check_branch
      %40 = sbr.rel (0) target = $region17
    $region16: #{tpu_custom_call.1} parent=1 // pred_region
      %s42 = ssub.s32 1024, 1024
      %43 = vsyncadd [#allocation7], %s42
      %s44 = sshll.u32 [#allocation8], 4
      %s45 = int_to_ptr.vmem [resolvable:$true] %s44
      %50 = dma.hbm_to_vmem [thread:$0]  %s3, 1024, %s45, [#allocation7], 64, 64, 4
    $region17: #{tpu_custom_call.1} parent=1 // pred_fallthru
      _
    // Predicated region
    $region18: #{tpu_custom_call.1} parent=1 // pred_check
      _
    $region19: #{tpu_custom_call.1} parent=1 // pred_check_branch
      %52 = sbr.rel (0) target = $region21
    $region20: #{tpu_custom_call.1} parent=1 // pred_region
      _
    $region21: #{tpu_custom_call.1} parent=1 // pred_fallthru
      _
    // Predicated region
    $region22: #{tpu_custom_call.1} parent=1 // pred_check
      _
    $region23: #{tpu_custom_call.1} parent=1 // pred_check_branch
      %54 = sbr.rel (0) target = $region25
    $region24: #{tpu_custom_call.1} parent=1 // pred_region
      %55 = dma.done [#allocation4], 2048
    $region25: #{tpu_custom_call.1} parent=1 // pred_fallthru
      _
    // Predicated region
    $region26: #{tpu_custom_call.1} parent=1 // pred_check
      _
    $region27: #{tpu_custom_call.1} parent=1 // pred_check_branch
      %57 = sbr.rel (0) target = $region29
    $region28: #{tpu_custom_call.1} parent=1 // pred_region
      %58 = dma.done [#allocation7], 8192
    $region29: #{tpu_custom_call.1} parent=1 // pred_fallthru
      _
    // Predicated region
    $region30: #{tpu_custom_call.1} parent=1 // pred_check
      _
    $region31: #{tpu_custom_call.1} parent=1 // pred_check_branch
      %60 = sbr.rel (0) target = $region33
    $region32: #{tpu_custom_call.1} parent=1 // pred_region
      %61 = dma.done [#allocation7], 1024
    $region33: #{tpu_custom_call.1} parent=1 // pred_fallthru
      _
    %v63 = vld [vmem:[#allocation3] sm:$0xff]
    %v64 = vld [vmem:[#allocation3 + $0x8] sm:$0xff]
    %v65 = vld [vmem:[#allocation3 + $0x10] sm:$0xff]
    %v66 = vld [vmem:[#allocation3 + $0x18] sm:$0xff]
    %v67 = vld [vmem:[#allocation3 + $0x20] sm:$0xff]
    %v68 = vld [vmem:[#allocation3 + $0x28] sm:$0xff]
    %v69 = vld [vmem:[#allocation3 + $0x30] sm:$0xff]
    %v70 = vld [vmem:[#allocation3 + $0x38] sm:$0xff]
    %v71 = vld [vmem:[#allocation3 + $0x40] sm:$0xff]
    %v72 = vld [vmem:[#allocation3 + $0x48] sm:$0xff]
    %v73 = vld [vmem:[#allocation3 + $0x50] sm:$0xff]
    %v74 = vld [vmem:[#allocation3 + $0x58] sm:$0xff]
    %v75 = vld [vmem:[#allocation3 + $0x60] sm:$0xff]
    %v76 = vld [vmem:[#allocation3 + $0x68] sm:$0xff]
    %v77 = vld [vmem:[#allocation3 + $0x70] sm:$0xff]
    %v78 = vld [vmem:[#allocation3 + $0x78] sm:$0xff]
    %v95 = vcombine.low %v63, %v65
    %v96 = vcombine.high %v63, %v65
    %v97 = vcombine.low %v67, %v69
    %v98 = vcombine.high %v67, %v69
    %v100 = vunpack.c.l.s4 1983009808
    %v101 = vunpack.c.0.s8 %v100
    %v102 = vlaneseq
    %v103 = vshrl.u32 %v102, 7
    %v104 = vsub.s32 %v101, %v103
    %v105 = vrot.slane %v95, %v104
    %v107 = vunpack.c.l.s4 1983009808
    %v108 = vunpack.c.0.s8 %v107
    %v109 = vlaneseq
    %v110 = vshrl.u32 %v109, 7
    %v111 = vsub.s32 %v108, %v110
    %v112 = vrot.slane %v96, %v111
    %v114 = vunpack.c.l.s4 1983009808
    %v115 = vunpack.c.0.s8 %v114
    %v116 = vlaneseq
    %v117 = vshrl.u32 %v116, 7
    %v118 = vsub.s32 %v115, %v117
    %v119 = vrot.slane %v97, %v118
    %v121 = vunpack.c.l.s4 1983009808
    %v122 = vunpack.c.0.s8 %v121
    %v123 = vlaneseq
    %v124 = vshrl.u32 %v123, 7
    %v125 = vsub.s32 %v122, %v124
    %v126 = vrot.slane %v98, %v125
    %v127 = vcombine.low %v105, %v119
    %v128 = vcombine.high %v105, %v119
    %v129 = vcombine.low %v112, %v126
    %v130 = vcombine.high %v112, %v126
    %v131 = vcombine.low %v64, %v66
    %v132 = vcombine.high %v64, %v66
    %v133 = vcombine.low %v68, %v70
    %v134 = vcombine.high %v68, %v70
    %v136 = vunpack.c.l.s4 1983009808
    %v137 = vunpack.c.0.s8 %v136
    %v138 = vlaneseq
    %v139 = vshrl.u32 %v138, 7
    %v140 = vsub.s32 %v137, %v139
    %v141 = vrot.slane %v131, %v140
    %v143 = vunpack.c.l.s4 1983009808
    %v144 = vunpack.c.0.s8 %v143
    %v145 = vlaneseq
    %v146 = vshrl.u32 %v145, 7
    %v147 = vsub.s32 %v144, %v146
    %v148 = vrot.slane %v132, %v147
    %v150 = vunpack.c.l.s4 1983009808
    %v151 = vunpack.c.0.s8 %v150
    %v152 = vlaneseq
    %v153 = vshrl.u32 %v152, 7
    %v154 = vsub.s32 %v151, %v153
    %v155 = vrot.slane %v133, %v154
    %v157 = vunpack.c.l.s4 1983009808
    %v158 = vunpack.c.0.s8 %v157
    %v159 = vlaneseq
    %v160 = vshrl.u32 %v159, 7
    %v161 = vsub.s32 %v158, %v160
    %v162 = vrot.slane %v134, %v161
    %v163 = vcombine.low %v141, %v155
    %v164 = vcombine.high %v141, %v155
    %v165 = vcombine.low %v148, %v162
    %v166 = vcombine.high %v148, %v162
    %v167 = vcombine.low %v71, %v73
    %v168 = vcombine.high %v71, %v73
    %v169 = vcombine.low %v75, %v77
    %v170 = vcombine.high %v75, %v77
    %v172 = vunpack.c.l.s4 1983009808
    %v173 = vunpack.c.0.s8 %v172
    %v174 = vlaneseq
    %v175 = vshrl.u32 %v174, 7
    %v176 = vsub.s32 %v173, %v175
    %v177 = vrot.slane %v167, %v176
    %v179 = vunpack.c.l.s4 1983009808
    %v180 = vunpack.c.0.s8 %v179
    %v181 = vlaneseq
    %v182 = vshrl.u32 %v181, 7
    %v183 = vsub.s32 %v180, %v182
    %v184 = vrot.slane %v168, %v183
    %v186 = vunpack.c.l.s4 1983009808
    %v187 = vunpack.c.0.s8 %v186
    %v188 = vlaneseq
    %v189 = vshrl.u32 %v188, 7
    %v190 = vsub.s32 %v187, %v189
    %v191 = vrot.slane %v169, %v190
    %v193 = vunpack.c.l.s4 1983009808
    %v194 = vunpack.c.0.s8 %v193
    %v195 = vlaneseq
    %v196 = vshrl.u32 %v195, 7
    %v197 = vsub.s32 %v194, %v196
    %v198 = vrot.slane %v170, %v197
    %v199 = vcombine.low %v177, %v191
    %v200 = vcombine.high %v177, %v191
    %v201 = vcombine.low %v184, %v198
    %v202 = vcombine.high %v184, %v198
    %v203 = vcombine.low %v72, %v74
    %v204 = vcombine.high %v72, %v74
    %v205 = vcombine.low %v76, %v78
    %v206 = vcombine.high %v76, %v78
    %v208 = vunpack.c.l.s4 1983009808
    %v209 = vunpack.c.0.s8 %v208
    %v210 = vlaneseq
    %v211 = vshrl.u32 %v210, 7
    %v212 = vsub.s32 %v209, %v211
    %v213 = vrot.slane %v203, %v212
    %v215 = vunpack.c.l.s4 1983009808
    %v216 = vunpack.c.0.s8 %v215
    %v217 = vlaneseq
    %v218 = vshrl.u32 %v217, 7
    %v219 = vsub.s32 %v216, %v218
    %v220 = vrot.slane %v204, %v219
    %v222 = vunpack.c.l.s4 1983009808
    %v223 = vunpack.c.0.s8 %v222
    %v224 = vlaneseq
    %v225 = vshrl.u32 %v224, 7
    %v226 = vsub.s32 %v223, %v225
    %v227 = vrot.slane %v205, %v226
    %v229 = vunpack.c.l.s4 1983009808
    %v230 = vunpack.c.0.s8 %v229
    %v231 = vlaneseq
    %v232 = vshrl.u32 %v231, 7
    %v233 = vsub.s32 %v230, %v232
    %v234 = vrot.slane %v206, %v233
    %v235 = vcombine.low %v213, %v227
    %v236 = vcombine.high %v213, %v227
    %v237 = vcombine.low %v220, %v234
    %v238 = vcombine.high %v220, %v234
    %v255 = vpack.c.bf16 %v199, %v127
    %v256 = vpack.c.bf16 %v200, %v128
    %v257 = vpack.c.bf16 %v201, %v129
    %v258 = vpack.c.bf16 %v202, %v130
    %v259 = vpack.c.bf16 %v235, %v163
    %v260 = vpack.c.bf16 %v236, %v164
    %v261 = vpack.c.bf16 %v237, %v165
    %v262 = vpack.c.bf16 %v238, %v166
    %v263 = vld [vmem:[#allocation6] sm:$0xf]
    %v264 = vld [vmem:[#allocation6 + $0x4] sm:$0xf]
    %v265 = vld [vmem:[#allocation6 + $0x8] sm:$0xf]
    %v266 = vld [vmem:[#allocation6 + $0xc] sm:$0xf]
    %v267 = vld [vmem:[#allocation6 + $0x10] sm:$0xf]
    %v268 = vld [vmem:[#allocation6 + $0x14] sm:$0xf]
    %v269 = vld [vmem:[#allocation6 + $0x18] sm:$0xf]
    %v270 = vld [vmem:[#allocation6 + $0x1c] sm:$0xf]
    %v271 = vld [vmem:[#allocation6 + $0x20] sm:$0xf]
    %v272 = vld [vmem:[#allocation6 + $0x24] sm:$0xf]
    %v273 = vld [vmem:[#allocation6 + $0x28] sm:$0xf]
    %v274 = vld [vmem:[#allocation6 + $0x2c] sm:$0xf]
    %v275 = vld [vmem:[#allocation6 + $0x30] sm:$0xf]
    %v276 = vld [vmem:[#allocation6 + $0x34] sm:$0xf]
    %v277 = vld [vmem:[#allocation6 + $0x38] sm:$0xf]
    %v278 = vld [vmem:[#allocation6 + $0x3c] sm:$0xf]
    %v279 = vld [vmem:[#allocation6 + $0x40] sm:$0xf]
    %v280 = vld [vmem:[#allocation6 + $0x44] sm:$0xf]
    %v281 = vld [vmem:[#allocation6 + $0x48] sm:$0xf]
    %v282 = vld [vmem:[#allocation6 + $0x4c] sm:$0xf]
    %v283 = vld [vmem:[#allocation6 + $0x50] sm:$0xf]
    %v284 = vld [vmem:[#allocation6 + $0x54] sm:$0xf]
    %v285 = vld [vmem:[#allocation6 + $0x58] sm:$0xf]
    %v286 = vld [vmem:[#allocation6 + $0x5c] sm:$0xf]
    %v287 = vld [vmem:[#allocation6 + $0x60] sm:$0xf]
    %v288 = vld [vmem:[#allocation6 + $0x64] sm:$0xf]
    %v289 = vld [vmem:[#allocation6 + $0x68] sm:$0xf]
    %v290 = vld [vmem:[#allocation6 + $0x6c] sm:$0xf]
    %v291 = vld [vmem:[#allocation6 + $0x70] sm:$0xf]
    %v292 = vld [vmem:[#allocation6 + $0x74] sm:$0xf]
    %v293 = vld [vmem:[#allocation6 + $0x78] sm:$0xf]
    %v294 = vld [vmem:[#allocation6 + $0x7c] sm:$0xf]
    %v295 = vld [vmem:[#allocation6 + $0x80] sm:$0xf]
    %v296 = vld [vmem:[#allocation6 + $0x84] sm:$0xf]
    %v297 = vld [vmem:[#allocation6 + $0x88] sm:$0xf]
    %v298 = vld [vmem:[#allocation6 + $0x8c] sm:$0xf]
    %v299 = vld [vmem:[#allocation6 + $0x90] sm:$0xf]
    %v300 = vld [vmem:[#allocation6 + $0x94] sm:$0xf]
    %v301 = vld [vmem:[#allocation6 + $0x98] sm:$0xf]
    %v302 = vld [vmem:[#allocation6 + $0x9c] sm:$0xf]
    %v303 = vld [vmem:[#allocation6 + $0xa0] sm:$0xf]
    %v304 = vld [vmem:[#allocation6 + $0xa4] sm:$0xf]
    %v305 = vld [vmem:[#allocation6 + $0xa8] sm:$0xf]
    %v306 = vld [vmem:[#allocation6 + $0xac] sm:$0xf]
    %v307 = vld [vmem:[#allocation6 + $0xb0] sm:$0xf]
    %v308 = vld [vmem:[#allocation6 + $0xb4] sm:$0xf]
    %v309 = vld [vmem:[#allocation6 + $0xb8] sm:$0xf]
    %v310 = vld [vmem:[#allocation6 + $0xbc] sm:$0xf]
    %v311 = vld [vmem:[#allocation6 + $0xc0] sm:$0xf]
    %v312 = vld [vmem:[#allocation6 + $0xc4] sm:$0xf]
    %v313 = vld [vmem:[#allocation6 + $0xc8] sm:$0xf]
    %v314 = vld [vmem:[#allocation6 + $0xcc] sm:$0xf]
    %v315 = vld [vmem:[#allocation6 + $0xd0] sm:$0xf]
    %v316 = vld [vmem:[#allocation6 + $0xd4] sm:$0xf]
    %v317 = vld [vmem:[#allocation6 + $0xd8] sm:$0xf]
    %v318 = vld [vmem:[#allocation6 + $0xdc] sm:$0xf]
    %v319 = vld [vmem:[#allocation6 + $0xe0] sm:$0xf]
    %v320 = vld [vmem:[#allocation6 + $0xe4] sm:$0xf]
    %v321 = vld [vmem:[#allocation6 + $0xe8] sm:$0xf]
    %v322 = vld [vmem:[#allocation6 + $0xec] sm:$0xf]
    %v323 = vld [vmem:[#allocation6 + $0xf0] sm:$0xf]
    %v324 = vld [vmem:[#allocation6 + $0xf4] sm:$0xf]
    %v325 = vld [vmem:[#allocation6 + $0xf8] sm:$0xf]
    %v326 = vld [vmem:[#allocation6 + $0xfc] sm:$0xf]
    %v327 = vld [vmem:[#allocation6 + $0x100] sm:$0xf]
    %v328 = vld [vmem:[#allocation6 + $0x104] sm:$0xf]
    %v329 = vld [vmem:[#allocation6 + $0x108] sm:$0xf]
    %v330 = vld [vmem:[#allocation6 + $0x10c] sm:$0xf]
    %v331 = vld [vmem:[#allocation6 + $0x110] sm:$0xf]
    %v332 = vld [vmem:[#allocation6 + $0x114] sm:$0xf]
    %v333 = vld [vmem:[#allocation6 + $0x118] sm:$0xf]
    %v334 = vld [vmem:[#allocation6 + $0x11c] sm:$0xf]
    %v335 = vld [vmem:[#allocation6 + $0x120] sm:$0xf]
    %v336 = vld [vmem:[#allocation6 + $0x124] sm:$0xf]
    %v337 = vld [vmem:[#allocation6 + $0x128] sm:$0xf]
    %v338 = vld [vmem:[#allocation6 + $0x12c] sm:$0xf]
    %v339 = vld [vmem:[#allocation6 + $0x130] sm:$0xf]
    %v340 = vld [vmem:[#allocation6 + $0x134] sm:$0xf]
    %v341 = vld [vmem:[#allocation6 + $0x138] sm:$0xf]
    %v342 = vld [vmem:[#allocation6 + $0x13c] sm:$0xf]
    %v343 = vld [vmem:[#allocation6 + $0x140] sm:$0xf]
    %v344 = vld [vmem:[#allocation6 + $0x144] sm:$0xf]
    %v345 = vld [vmem:[#allocation6 + $0x148] sm:$0xf]
    %v346 = vld [vmem:[#allocation6 + $0x14c] sm:$0xf]
    %v347 = vld [vmem:[#allocation6 + $0x150] sm:$0xf]
    %v348 = vld [vmem:[#allocation6 + $0x154] sm:$0xf]
    %v349 = vld [vmem:[#allocation6 + $0x158] sm:$0xf]
    %v350 = vld [vmem:[#allocation6 + $0x15c] sm:$0xf]
    %v351 = vld [vmem:[#allocation6 + $0x160] sm:$0xf]
    %v352 = vld [vmem:[#allocation6 + $0x164] sm:$0xf]
    %v353 = vld [vmem:[#allocation6 + $0x168] sm:$0xf]
    %v354 = vld [vmem:[#allocation6 + $0x16c] sm:$0xf]
    %v355 = vld [vmem:[#allocation6 + $0x170] sm:$0xf]
    %v356 = vld [vmem:[#allocation6 + $0x174] sm:$0xf]
    %v357 = vld [vmem:[#allocation6 + $0x178] sm:$0xf]
    %v358 = vld [vmem:[#allocation6 + $0x17c] sm:$0xf]
    %v359 = vld [vmem:[#allocation6 + $0x180] sm:$0xf]
    %v360 = vld [vmem:[#allocation6 + $0x184] sm:$0xf]
    %v361 = vld [vmem:[#allocation6 + $0x188] sm:$0xf]
    %v362 = vld [vmem:[#allocation6 + $0x18c] sm:$0xf]
    %v363 = vld [vmem:[#allocation6 + $0x190] sm:$0xf]
    %v364 = vld [vmem:[#allocation6 + $0x194] sm:$0xf]
    %v365 = vld [vmem:[#allocation6 + $0x198] sm:$0xf]
    %v366 = vld [vmem:[#allocation6 + $0x19c] sm:$0xf]
    %v367 = vld [vmem:[#allocation6 + $0x1a0] sm:$0xf]
    %v368 = vld [vmem:[#allocation6 + $0x1a4] sm:$0xf]
    %v369 = vld [vmem:[#allocation6 + $0x1a8] sm:$0xf]
    %v370 = vld [vmem:[#allocation6 + $0x1ac] sm:$0xf]
    %v371 = vld [vmem:[#allocation6 + $0x1b0] sm:$0xf]
    %v372 = vld [vmem:[#allocation6 + $0x1b4] sm:$0xf]
    %v373 = vld [vmem:[#allocation6 + $0x1b8] sm:$0xf]
    %v374 = vld [vmem:[#allocation6 + $0x1bc] sm:$0xf]
    %v375 = vld [vmem:[#allocation6 + $0x1c0] sm:$0xf]
    %v376 = vld [vmem:[#allocation6 + $0x1c4] sm:$0xf]
    %v377 = vld [vmem:[#allocation6 + $0x1c8] sm:$0xf]
    %v378 = vld [vmem:[#allocation6 + $0x1cc] sm:$0xf]
    %v379 = vld [vmem:[#allocation6 + $0x1d0] sm:$0xf]
    %v380 = vld [vmem:[#allocation6 + $0x1d4] sm:$0xf]
    %v381 = vld [vmem:[#allocation6 + $0x1d8] sm:$0xf]
    %v382 = vld [vmem:[#allocation6 + $0x1dc] sm:$0xf]
    %v383 = vld [vmem:[#allocation6 + $0x1e0] sm:$0xf]
    %v384 = vld [vmem:[#allocation6 + $0x1e4] sm:$0xf]
    %v385 = vld [vmem:[#allocation6 + $0x1e8] sm:$0xf]
    %v386 = vld [vmem:[#allocation6 + $0x1ec] sm:$0xf]
    %v387 = vld [vmem:[#allocation6 + $0x1f0] sm:$0xf]
    %v388 = vld [vmem:[#allocation6 + $0x1f4] sm:$0xf]
    %v389 = vld [vmem:[#allocation6 + $0x1f8] sm:$0xf]
    %v390 = vld [vmem:[#allocation6 + $0x1fc] sm:$0xf]
    %v391 = vld [vmem:[%s2] sm:$0x1]
    %v393 = vlaneseq
    %v394 = vshrl.u32 %v393, 7
    %v395 = vsub.s32 0, %v394
    %v396 = vrot.slane %v391, %v395
    %v526 = vunpack.c.l.b16 %v263
    %v527 = vunpack.c.l.b16 %v264
    %v528 = vunpack.c.l.b16 %v265
    %v529 = vunpack.c.l.b16 %v266
    %v530 = vunpack.c.l.b16 %v267
    %v531 = vunpack.c.l.b16 %v268
    %v532 = vunpack.c.l.b16 %v269
    %v533 = vunpack.c.l.b16 %v270
    %v534 = vunpack.c.l.b16 %v271
    %v535 = vunpack.c.l.b16 %v272
    %v536 = vunpack.c.l.b16 %v273
    %v537 = vunpack.c.l.b16 %v274
    %v538 = vunpack.c.l.b16 %v275
    %v539 = vunpack.c.l.b16 %v276
    %v540 = vunpack.c.l.b16 %v277
    %v541 = vunpack.c.l.b16 %v278
    %v542 = vunpack.c.l.b16 %v279
    %v543 = vunpack.c.l.b16 %v280
    %v544 = vunpack.c.l.b16 %v281
    %v545 = vunpack.c.l.b16 %v282
    %v546 = vunpack.c.l.b16 %v283
    %v547 = vunpack.c.l.b16 %v284
    %v548 = vunpack.c.l.b16 %v285
    %v549 = vunpack.c.l.b16 %v286
    %v550 = vunpack.c.l.b16 %v287
    %v551 = vunpack.c.l.b16 %v288
    %v552 = vunpack.c.l.b16 %v289
    %v553 = vunpack.c.l.b16 %v290
    %v554 = vunpack.c.l.b16 %v291
    %v555 = vunpack.c.l.b16 %v292
    %v556 = vunpack.c.l.b16 %v293
    %v557 = vunpack.c.l.b16 %v294
    %v558 = vunpack.c.l.b16 %v295
    %v559 = vunpack.c.l.b16 %v296
    %v560 = vunpack.c.l.b16 %v297
    %v561 = vunpack.c.l.b16 %v298
    %v562 = vunpack.c.l.b16 %v299
    %v563 = vunpack.c.l.b16 %v300
    %v564 = vunpack.c.l.b16 %v301
    %v565 = vunpack.c.l.b16 %v302
    %v566 = vunpack.c.l.b16 %v303
    %v567 = vunpack.c.l.b16 %v304
    %v568 = vunpack.c.l.b16 %v305
    %v569 = vunpack.c.l.b16 %v306
    %v570 = vunpack.c.l.b16 %v307
    %v571 = vunpack.c.l.b16 %v308
    %v572 = vunpack.c.l.b16 %v309
    %v573 = vunpack.c.l.b16 %v310
    %v574 = vunpack.c.l.b16 %v311
    %v575 = vunpack.c.l.b16 %v312
    %v576 = vunpack.c.l.b16 %v313
    %v577 = vunpack.c.l.b16 %v314
    %v578 = vunpack.c.l.b16 %v315
    %v579 = vunpack.c.l.b16 %v316
    %v580 = vunpack.c.l.b16 %v317
    %v581 = vunpack.c.l.b16 %v318
    %v582 = vunpack.c.l.b16 %v319
    %v583 = vunpack.c.l.b16 %v320
    %v584 = vunpack.c.l.b16 %v321
    %v585 = vunpack.c.l.b16 %v322
    %v586 = vunpack.c.l.b16 %v323
    %v587 = vunpack.c.l.b16 %v324
    %v588 = vunpack.c.l.b16 %v325
    %v589 = vunpack.c.l.b16 %v326
    %v590 = vunpack.c.l.b16 %v327
    %v591 = vunpack.c.l.b16 %v328
    %v592 = vunpack.c.l.b16 %v329
    %v593 = vunpack.c.l.b16 %v330
    %v594 = vunpack.c.l.b16 %v331
    %v595 = vunpack.c.l.b16 %v332
    %v596 = vunpack.c.l.b16 %v333
    %v597 = vunpack.c.l.b16 %v334
    %v598 = vunpack.c.l.b16 %v335
    %v599 = vunpack.c.l.b16 %v336
    %v600 = vunpack.c.l.b16 %v337
    %v601 = vunpack.c.l.b16 %v338
    %v602 = vunpack.c.l.b16 %v339
    %v603 = vunpack.c.l.b16 %v340
    %v604 = vunpack.c.l.b16 %v341
    %v605 = vunpack.c.l.b16 %v342
    %v606 = vunpack.c.l.b16 %v343
    %v607 = vunpack.c.l.b16 %v344
    %v608 = vunpack.c.l.b16 %v345
    %v609 = vunpack.c.l.b16 %v346
    %v610 = vunpack.c.l.b16 %v347
    %v611 = vunpack.c.l.b16 %v348
    %v612 = vunpack.c.l.b16 %v349
    %v613 = vunpack.c.l.b16 %v350
    %v614 = vunpack.c.l.b16 %v351
    %v615 = vunpack.c.l.b16 %v352
    %v616 = vunpack.c.l.b16 %v353
    %v617 = vunpack.c.l.b16 %v354
    %v618 = vunpack.c.l.b16 %v355
    %v619 = vunpack.c.l.b16 %v356
    %v620 = vunpack.c.l.b16 %v357
    %v621 = vunpack.c.l.b16 %v358
    %v622 = vunpack.c.l.b16 %v359
    %v623 = vunpack.c.l.b16 %v360
    %v624 = vunpack.c.l.b16 %v361
    %v625 = vunpack.c.l.b16 %v362
    %v626 = vunpack.c.l.b16 %v363
    %v627 = vunpack.c.l.b16 %v364
    %v628 = vunpack.c.l.b16 %v365
    %v629 = vunpack.c.l.b16 %v366
    %v630 = vunpack.c.l.b16 %v367
    %v631 = vunpack.c.l.b16 %v368
    %v632 = vunpack.c.l.b16 %v369
    %v633 = vunpack.c.l.b16 %v370
    %v634 = vunpack.c.l.b16 %v371
    %v635 = vunpack.c.l.b16 %v372
    %v636 = vunpack.c.l.b16 %v373
    %v637 = vunpack.c.l.b16 %v374
    %v638 = vunpack.c.l.b16 %v375
    %v639 = vunpack.c.l.b16 %v376
    %v640 = vunpack.c.l.b16 %v377
    %v641 = vunpack.c.l.b16 %v378
    %v642 = vunpack.c.l.b16 %v379
    %v643 = vunpack.c.l.b16 %v380
    %v644 = vunpack.c.l.b16 %v381
    %v645 = vunpack.c.l.b16 %v382
    %v646 = vunpack.c.l.b16 %v383
    %v647 = vunpack.c.l.b16 %v384
    %v648 = vunpack.c.l.b16 %v385
    %v649 = vunpack.c.l.b16 %v386
    %v650 = vunpack.c.l.b16 %v387
    %v651 = vunpack.c.l.b16 %v388
    %v652 = vunpack.c.l.b16 %v389
    %v653 = vunpack.c.l.b16 %v390
    %v654 = vpack.c.b16 %v527, %v526
    %v655 = vpack.c.b16 %v529, %v528
    %v656 = vpack.c.b16 %v531, %v530
    %v657 = vpack.c.b16 %v533, %v532
    %v658 = vpack.c.b16 %v535, %v534
    %v659 = vpack.c.b16 %v537, %v536
    %v660 = vpack.c.b16 %v539, %v538
    %v661 = vpack.c.b16 %v541, %v540
    %v662 = vpack.c.b16 %v543, %v542
    %v663 = vpack.c.b16 %v545, %v544
    %v664 = vpack.c.b16 %v547, %v546
    %v665 = vpack.c.b16 %v549, %v548
    %v666 = vpack.c.b16 %v551, %v550
    %v667 = vpack.c.b16 %v553, %v552
    %v668 = vpack.c.b16 %v555, %v554
    %v669 = vpack.c.b16 %v557, %v556
    %v670 = vpack.c.b16 %v559, %v558
    %v671 = vpack.c.b16 %v561, %v560
    %v672 = vpack.c.b16 %v563, %v562
    %v673 = vpack.c.b16 %v565, %v564
    %v674 = vpack.c.b16 %v567, %v566
    %v675 = vpack.c.b16 %v569, %v568
    %v676 = vpack.c.b16 %v571, %v570
    %v677 = vpack.c.b16 %v573, %v572
    %v678 = vpack.c.b16 %v575, %v574
    %v679 = vpack.c.b16 %v577, %v576
    %v680 = vpack.c.b16 %v579, %v578
    %v681 = vpack.c.b16 %v581, %v580
    %v682 = vpack.c.b16 %v583, %v582
    %v683 = vpack.c.b16 %v585, %v584
    %v684 = vpack.c.b16 %v587, %v586
    %v685 = vpack.c.b16 %v589, %v588
    %v686 = vpack.c.b16 %v591, %v590
    %v687 = vpack.c.b16 %v593, %v592
    %v688 = vpack.c.b16 %v595, %v594
    %v689 = vpack.c.b16 %v597, %v596
    %v690 = vpack.c.b16 %v599, %v598
    %v691 = vpack.c.b16 %v601, %v600
    %v692 = vpack.c.b16 %v603, %v602
    %v693 = vpack.c.b16 %v605, %v604
    %v694 = vpack.c.b16 %v607, %v606
    %v695 = vpack.c.b16 %v609, %v608
    %v696 = vpack.c.b16 %v611, %v610
    %v697 = vpack.c.b16 %v613, %v612
    %v698 = vpack.c.b16 %v615, %v614
    %v699 = vpack.c.b16 %v617, %v616
    %v700 = vpack.c.b16 %v619, %v618
    %v701 = vpack.c.b16 %v621, %v620
    %v702 = vpack.c.b16 %v623, %v622
    %v703 = vpack.c.b16 %v625, %v624
    %v704 = vpack.c.b16 %v627, %v626
    %v705 = vpack.c.b16 %v629, %v628
    %v706 = vpack.c.b16 %v631, %v630
    %v707 = vpack.c.b16 %v633, %v632
    %v708 = vpack.c.b16 %v635, %v634
    %v709 = vpack.c.b16 %v637, %v636
    %v710 = vpack.c.b16 %v639, %v638
    %v711 = vpack.c.b16 %v641, %v640
    %v712 = vpack.c.b16 %v643, %v642
    %v713 = vpack.c.b16 %v645, %v644
    %v714 = vpack.c.b16 %v647, %v646
    %v715 = vpack.c.b16 %v649, %v648
    %v716 = vpack.c.b16 %v651, %v650
    %v717 = vpack.c.b16 %v653, %v652
    %782 = vmatprep.subr.bf16.mxu0 0
    %783 = vmatpush1.bf16.msra.mxu0 %v661
    %784 = vmatprep.subr.bf16.mxu0 0
    %785 = vmatpush1.bf16.msra.mxu0 %v660
    %786 = vmatprep.subr.bf16.mxu0 0
    %787 = vmatpush1.bf16.msra.mxu0 %v659
    %788 = vmatprep.subr.bf16.mxu0 0
    %789 = vmatpush1.bf16.msra.mxu0 %v658
    %790 = vmatprep.subr.bf16.mxu0 0
    %791 = vmatpush1.bf16.msra.mxu0 %v657
    %792 = vmatprep.subr.bf16.mxu0 0
    %793 = vmatpush1.bf16.msra.mxu0 %v656
    %794 = vmatprep.subr.bf16.mxu0 0
    %795 = vmatpush1.bf16.msra.mxu0 %v655
    %796 = vmatprep.subr.bf16.mxu0 0
    %797 = vmatpush1.bf16.msra.mxu0 %v654
    %798 = vmatprep.subr.bf16.mxu0 0
    %799 = vmatpush2.bf16.msra.mxu0 %v669
    %800 = vmatprep.subr.bf16.mxu0 0
    %801 = vmatpush2.bf16.msra.mxu0 %v668
    %802 = vmatprep.subr.bf16.mxu0 0
    %803 = vmatpush2.bf16.msra.mxu0 %v667
    %804 = vmatprep.subr.bf16.mxu0 0
    %805 = vmatpush2.bf16.msra.mxu0 %v666
    %806 = vmatprep.subr.bf16.mxu0 0
    %807 = vmatpush2.bf16.msra.mxu0 %v665
    %808 = vmatprep.subr.bf16.mxu0 0
    %809 = vmatpush2.bf16.msra.mxu0 %v664
    %810 = vmatprep.subr.bf16.mxu0 0
    %811 = vmatpush2.bf16.msra.mxu0 %v663
    %812 = vmatprep.subr.bf16.mxu0 0
    %813 = vmatpush2.bf16.msra.mxu0 %v662
    %814 = vmatprep.mubr.bf16.mxu0 %v256
    %815 = vmatmul.mubr.bf16.gmra.mxu0 %v255
    %v816 = vpop.f32.mrf.mxu0
    %v817 = vadd.f32 %v396, %v816
    %v818 = vpop.f32.mrf.mxu0
    %v819 = vpop.f32.mrf.mxu0
    %v820 = vadd.f32 %v396, %v819
    %v821 = vpop.f32.mrf.mxu0
    %822 = vdwg.mxu0
    %823 = vmatprep.subr.bf16.mxu0 0
    %824 = vmatpush1.bf16.msra.mxu0 %v677
    %825 = vmatprep.subr.bf16.mxu0 0
    %826 = vmatpush1.bf16.msra.mxu0 %v676
    %827 = vmatprep.subr.bf16.mxu0 0
    %828 = vmatpush1.bf16.msra.mxu0 %v675
    %829 = vmatprep.subr.bf16.mxu0 0
    %830 = vmatpush1.bf16.msra.mxu0 %v674
    %831 = vmatprep.subr.bf16.mxu0 0
    %832 = vmatpush1.bf16.msra.mxu0 %v673
    %833 = vmatprep.subr.bf16.mxu0 0
    %834 = vmatpush1.bf16.msra.mxu0 %v672
    %835 = vmatprep.subr.bf16.mxu0 0
    %836 = vmatpush1.bf16.msra.mxu0 %v671
    %837 = vmatprep.subr.bf16.mxu0 0
    %838 = vmatpush1.bf16.msra.mxu0 %v670
    %839 = vmatprep.subr.bf16.mxu0 0
    %840 = vmatpush2.bf16.msra.mxu0 %v685
    %841 = vmatprep.subr.bf16.mxu0 0
    %842 = vmatpush2.bf16.msra.mxu0 %v684
    %843 = vmatprep.subr.bf16.mxu0 0
    %844 = vmatpush2.bf16.msra.mxu0 %v683
    %845 = vmatprep.subr.bf16.mxu0 0
    %846 = vmatpush2.bf16.msra.mxu0 %v682
    %847 = vmatprep.subr.bf16.mxu0 0
    %848 = vmatpush2.bf16.msra.mxu0 %v681
    %849 = vmatprep.subr.bf16.mxu0 0
    %850 = vmatpush2.bf16.msra.mxu0 %v680
    %851 = vmatprep.subr.bf16.mxu0 0
    %852 = vmatpush2.bf16.msra.mxu0 %v679
    %853 = vmatprep.subr.bf16.mxu0 0
    %854 = vmatpush2.bf16.msra.mxu0 %v678
    %855 = vmatprep.mubr.bf16.mxu0 %v258
    %856 = vmatmul.mubr.bf16.gmra.mxu0 %v257
    %v857 = vpop.f32.mrf.mxu0
    %v858 = vadd.f32 %v817, %v857
    %v859 = vpop.f32.mrf.mxu0
    %v860 = vpop.f32.mrf.mxu0
    %v861 = vadd.f32 %v820, %v860
    %v862 = vpop.f32.mrf.mxu0
    %863 = vdwg.mxu0
    %864 = vmatprep.subr.bf16.mxu0 0
    %865 = vmatpush1.bf16.msra.mxu0 %v693
    %866 = vmatprep.subr.bf16.mxu0 0
    %867 = vmatpush1.bf16.msra.mxu0 %v692
    %868 = vmatprep.subr.bf16.mxu0 0
    %869 = vmatpush1.bf16.msra.mxu0 %v691
    %870 = vmatprep.subr.bf16.mxu0 0
    %871 = vmatpush1.bf16.msra.mxu0 %v690
    %872 = vmatprep.subr.bf16.mxu0 0
    %873 = vmatpush1.bf16.msra.mxu0 %v689
    %874 = vmatprep.subr.bf16.mxu0 0
    %875 = vmatpush1.bf16.msra.mxu0 %v688
    %876 = vmatprep.subr.bf16.mxu0 0
    %877 = vmatpush1.bf16.msra.mxu0 %v687
    %878 = vmatprep.subr.bf16.mxu0 0
    %879 = vmatpush1.bf16.msra.mxu0 %v686
    %880 = vmatprep.subr.bf16.mxu0 0
    %881 = vmatpush2.bf16.msra.mxu0 %v701
    %882 = vmatprep.subr.bf16.mxu0 0
    %883 = vmatpush2.bf16.msra.mxu0 %v700
    %884 = vmatprep.subr.bf16.mxu0 0
    %885 = vmatpush2.bf16.msra.mxu0 %v699
    %886 = vmatprep.subr.bf16.mxu0 0
    %887 = vmatpush2.bf16.msra.mxu0 %v698
    %888 = vmatprep.subr.bf16.mxu0 0
    %889 = vmatpush2.bf16.msra.mxu0 %v697
    %890 = vmatprep.subr.bf16.mxu0 0
    %891 = vmatpush2.bf16.msra.mxu0 %v696
    %892 = vmatprep.subr.bf16.mxu0 0
    %893 = vmatpush2.bf16.msra.mxu0 %v695
    %894 = vmatprep.subr.bf16.mxu0 0
    %895 = vmatpush2.bf16.msra.mxu0 %v694
    %896 = vmatprep.mubr.bf16.mxu0 %v260
    %897 = vmatmul.mubr.bf16.gmra.mxu0 %v259
    %v898 = vpop.f32.mrf.mxu0
    %v899 = vadd.f32 %v858, %v898
    %v900 = vpop.f32.mrf.mxu0
    %v901 = vpop.f32.mrf.mxu0
    %v902 = vadd.f32 %v861, %v901
    %v903 = vpop.f32.mrf.mxu0
    %904 = vdwg.mxu0
    %905 = vmatprep.subr.bf16.mxu0 0
    %906 = vmatpush1.bf16.msra.mxu0 %v709
    %907 = vmatprep.subr.bf16.mxu0 0
    %908 = vmatpush1.bf16.msra.mxu0 %v708
    %909 = vmatprep.subr.bf16.mxu0 0
    %910 = vmatpush1.bf16.msra.mxu0 %v707
    %911 = vmatprep.subr.bf16.mxu0 0
    %912 = vmatpush1.bf16.msra.mxu0 %v706
    %913 = vmatprep.subr.bf16.mxu0 0
    %914 = vmatpush1.bf16.msra.mxu0 %v705
    %915 = vmatprep.subr.bf16.mxu0 0
    %916 = vmatpush1.bf16.msra.mxu0 %v704
    %917 = vmatprep.subr.bf16.mxu0 0
    %918 = vmatpush1.bf16.msra.mxu0 %v703
    %919 = vmatprep.subr.bf16.mxu0 0
    %920 = vmatpush1.bf16.msra.mxu0 %v702
    %921 = vmatprep.subr.bf16.mxu0 0
    %922 = vmatpush2.bf16.msra.mxu0 %v717
    %923 = vmatprep.subr.bf16.mxu0 0
    %924 = vmatpush2.bf16.msra.mxu0 %v716
    %925 = vmatprep.subr.bf16.mxu0 0
    %926 = vmatpush2.bf16.msra.mxu0 %v715
    %927 = vmatprep.subr.bf16.mxu0 0
    %928 = vmatpush2.bf16.msra.mxu0 %v714
    %929 = vmatprep.subr.bf16.mxu0 0
    %930 = vmatpush2.bf16.msra.mxu0 %v713
    %931 = vmatprep.subr.bf16.mxu0 0
    %932 = vmatpush2.bf16.msra.mxu0 %v712
    %933 = vmatprep.subr.bf16.mxu0 0
    %934 = vmatpush2.bf16.msra.mxu0 %v711
    %935 = vmatprep.subr.bf16.mxu0 0
    %936 = vmatpush2.bf16.msra.mxu0 %v710
    %937 = vmatprep.mubr.bf16.mxu0 %v262
    %938 = vmatmul.mubr.bf16.gmra.mxu0 %v261
    %v939 = vpop.f32.mrf.mxu0
    %v940 = vadd.f32 %v899, %v939
    %v941 = vpop.f32.mrf.mxu0
    %v942 = vpop.f32.mrf.mxu0
    %v943 = vadd.f32 %v902, %v942
    %v944 = vpop.f32.mrf.mxu0
    %945 = vdwg.mxu0
    %v946 = vmax.f32 %v940, 0.0
    %v947 = vmax.f32 %v943, 0.0
    %v948 = vpack.c.bf16 %v947, %v946
    %v950 = vunpack.c.l.b16 %v948
    %v951 = vunpack.c.h.b16 %v948
    %v952 = vpack.c.b16 %v950, %v950
    %v953 = vpack.c.b16 %v951, %v951
    %956 = vst [vmem:[#allocation2] sm:$0xf] %v952
    %957 = vst [vmem:[#allocation2 + $0x4] sm:$0xf] %v953
    %v958 = vld [vmem:[#allocation2] sm:$0xf]
    %v959 = vld [vmem:[#allocation2 + $0x4] sm:$0xf]
    %v960 = vld [vmem:[#allocation8] sm:$0xf]
    %v961 = vld [vmem:[#allocation8 + $0x4] sm:$0xf]
    %v962 = vld [vmem:[#allocation8 + $0x8] sm:$0xf]
    %v963 = vld [vmem:[#allocation8 + $0xc] sm:$0xf]
    %v964 = vld [vmem:[#allocation8 + $0x10] sm:$0xf]
    %v965 = vld [vmem:[#allocation8 + $0x14] sm:$0xf]
    %v966 = vld [vmem:[#allocation8 + $0x18] sm:$0xf]
    %v967 = vld [vmem:[#allocation8 + $0x1c] sm:$0xf]
    %v968 = vld [vmem:[#allocation8 + $0x20] sm:$0xf]
    %v969 = vld [vmem:[#allocation8 + $0x24] sm:$0xf]
    %v970 = vld [vmem:[#allocation8 + $0x28] sm:$0xf]
    %v971 = vld [vmem:[#allocation8 + $0x2c] sm:$0xf]
    %v972 = vld [vmem:[#allocation8 + $0x30] sm:$0xf]
    %v973 = vld [vmem:[#allocation8 + $0x34] sm:$0xf]
    %v974 = vld [vmem:[#allocation8 + $0x38] sm:$0xf]
    %v975 = vld [vmem:[#allocation8 + $0x3c] sm:$0xf]
    %v976 = vld [vmem:[%s4] sm:$0x1]
    %v978 = vlaneseq
    %v979 = vshrl.u32 %v978, 7
    %v980 = vsub.s32 0, %v979
    %v981 = vrot.slane %v976, %v980
    %v985 = vunpack.c.l.b16 %v958
    %v986 = vunpack.c.l.b16 %v959
    %v987 = vpack.c.b16 %v986, %v985
    %v1005 = vunpack.c.l.b16 %v960
    %v1006 = vunpack.c.l.b16 %v961
    %v1007 = vunpack.c.l.b16 %v962
    %v1008 = vunpack.c.l.b16 %v963
    %v1009 = vunpack.c.l.b16 %v964
    %v1010 = vunpack.c.l.b16 %v965
    %v1011 = vunpack.c.l.b16 %v966
    %v1012 = vunpack.c.l.b16 %v967
    %v1013 = vunpack.c.l.b16 %v968
    %v1014 = vunpack.c.l.b16 %v969
    %v1015 = vunpack.c.l.b16 %v970
    %v1016 = vunpack.c.l.b16 %v971
    %v1017 = vunpack.c.l.b16 %v972
    %v1018 = vunpack.c.l.b16 %v973
    %v1019 = vunpack.c.l.b16 %v974
    %v1020 = vunpack.c.l.b16 %v975
    %v1021 = vpack.c.b16 %v1006, %v1005
    %v1022 = vpack.c.b16 %v1008, %v1007
    %v1023 = vpack.c.b16 %v1010, %v1009
    %v1024 = vpack.c.b16 %v1012, %v1011
    %v1025 = vpack.c.b16 %v1014, %v1013
    %v1026 = vpack.c.b16 %v1016, %v1015
    %v1027 = vpack.c.b16 %v1018, %v1017
    %v1028 = vpack.c.b16 %v1020, %v1019
    %1037 = vmatprep.subr.bf16.mxu0 0
    %1038 = vmatpush1.bf16.msra.mxu0 %v1028
    %1039 = vmatprep.subr.bf16.mxu0 0
    %1040 = vmatpush1.bf16.msra.mxu0 %v1027
    %1041 = vmatprep.subr.bf16.mxu0 0
    %1042 = vmatpush1.bf16.msra.mxu0 %v1026
    %1043 = vmatprep.subr.bf16.mxu0 0
    %1044 = vmatpush1.bf16.msra.mxu0 %v1025
    %1045 = vmatprep.subr.bf16.mxu0 0
    %1046 = vmatpush1.bf16.msra.mxu0 %v1024
    %1047 = vmatprep.subr.bf16.mxu0 0
    %1048 = vmatpush1.bf16.msra.mxu0 %v1023
    %1049 = vmatprep.subr.bf16.mxu0 0
    %1050 = vmatpush1.bf16.msra.mxu0 %v1022
    %1051 = vmatprep.subr.bf16.mxu0 0
    %1052 = vmatpush1.bf16.msra.mxu0 %v1021
    %1053 = vmatprep.subr.bf16.mxu0 0
    %1054 = vmatpush2.bf16.msra.mxu0 0
    %1055 = vmatprep.subr.bf16.mxu0 0
    %1056 = vmatpush2.bf16.msra.mxu0 0
    %1057 = vmatprep.subr.bf16.mxu0 0
    %1058 = vmatpush2.bf16.msra.mxu0 0
    %1059 = vmatprep.subr.bf16.mxu0 0
    %1060 = vmatpush2.bf16.msra.mxu0 0
    %1061 = vmatprep.subr.bf16.mxu0 0
    %1062 = vmatpush2.bf16.msra.mxu0 0
    %1063 = vmatprep.subr.bf16.mxu0 0
    %1064 = vmatpush2.bf16.msra.mxu0 0
    %1065 = vmatprep.subr.bf16.mxu0 0
    %1066 = vmatpush2.bf16.msra.mxu0 0
    %1067 = vmatprep.subr.bf16.mxu0 0
    %1068 = vmatpush2.bf16.msra.mxu0 0
    %1069 = vmatprep.mubr.bf16.mxu0 0
    %1070 = vmatmul.mubr.bf16.gmra.mxu0 %v987
    %v1071 = vpop.f32.mrf.mxu0
    %v1072 = vadd.f32 %v981, %v1071
    %v1073 = vpop.f32.mrf.mxu0
    %v1074 = vpop.f32.mrf.mxu0
    %v1075 = vadd.f32 %v981, %v1074
    %v1076 = vpop.f32.mrf.mxu0
    %1077 = vdwg.mxu0
    %v1078 = vmax.f32 %v1072, 0.0
    %v1079 = vmax.f32 %v1075, 0.0
    %1080 = vst [vmem:[#allocation9] sm:$0xff] %v1078
    %1081 = vst [vmem:[#allocation9 + $0x8] sm:$0xff] %v1079
    // Predicated region
    $region34: #{tpu_custom_call.1} parent=1 // pred_check
      _
    $region35: #{tpu_custom_call.1} parent=1 // pred_check_branch
      %1083 = sbr.rel (0) target = $region37
    $region36: #{tpu_custom_call.1} parent=1 // pred_region
      %s1085 = ssub.s32 256, 32
      %1086 = vsyncadd [#allocation5], %s1085
      %s1087 = sshll.u32 [#allocation9], 4
      %s1088 = int_to_ptr.vmem [resolvable:$true] %s1087
      %1093 = dma.vmem_to_hbm [thread:$0]  %s1088, 32, %s5, [#allocation5], 32, 32, 2
    $region37: #{tpu_custom_call.1} parent=1 // pred_fallthru
      _
    // Predicated region
    $region38: #{tpu_custom_call.1} parent=1 // pred_check
      _
    $region39: #{tpu_custom_call.1} parent=1 // pred_check_branch
      %1095 = sbr.rel (0) target = $region41
    $region40: #{tpu_custom_call.1} parent=1 // pred_region
      %1096 = dma.done [#allocation5], 256
    $region41: #{tpu_custom_call.1} parent=1 // pred_fallthru
      _
    %1097 = vsyncpa [#allocation4], 1
    %1098 = vsyncpa [#allocation7], 1
    %1099 = vsyncpa [#allocation5], 1

</llo_original>
